<compile_context>
chip_gen: v5e
topology: v5e:2x2
jax: 0.10.0
libtpu: 0.0.40
codegen_flags: <defaults>
</compile_context>

<pallas_src>
import functools

import jax
import jax.numpy as jnp
from jax.experimental import pallas as pl
from jax.experimental.pallas import tpu as pltpu

SLOPE = 0.01   # LeakyReLU / VNLeakyReLU negative slope
EPS = 1e-6     # VNLeakyReLU denominator epsilon

# indices into the packed weight-slab layout (order fixed by pack_params)
(I_L1_WV1, I_L1_WV2, I_L1_WSN, I_L1_WSS, I_L1_WG, I_L1_BG, I_L1_WD,
 I_L2_WV1, I_L2_WV2, I_L2_WSN, I_L2_WSS, I_L2_WG, I_L2_BG,
 I_HD_WV1, I_HD_WSN, I_HD_WSS, I_HD_WV2, I_HD_WG, I_HD_BG) = range(19)


def _round_up(x, m):
    return ((x + m - 1) // m) * m


# --------------------------------- kernel -----------------------------------
def position_predictor_kernel(h_ref, v_ref, w_ref, out_ref, *, layout,
                              n_component):
    k = n_component

    def wt(idx, dtype=jnp.bfloat16):
        # static sub-view of the single resident weight slab (free slicing)
        off, r, c = layout[idx]
        return w_ref[off:off + r, 0:c].astype(dtype)

    def mxu(a, b):
        # bf16 MXU operands, f32 accumulation (safe on v5e / v6e / v7x)
        return jnp.dot(a.astype(jnp.bfloat16), b,
                       preferred_element_type=jnp.float32)

    def gv_linear(s_in, px, py, pz, i_wv1, i_wv2, i_wsn, i_wss, i_wg, i_bg):
        wv1, wv2 = wt(i_wv1), wt(i_wv2)
        wsn, wss = wt(i_wsn), wt(i_wss)
        wg, bg = wt(i_wg), wt(i_bg, jnp.float32)
        ix = mxu(px, wv1)
        iy = mxu(py, wv1)
        iz = mxu(pz, wv1)
        norm = jnp.sqrt(ix * ix + iy * iy + iz * iz)          # (tn, H) f32
        out_s = mxu(norm, wsn) + mxu(s_in, wss)               # split [norm|s]
        gate = jax.nn.sigmoid(mxu(out_s, wg) + bg)            # (tn, out_v)
        return out_s, gate * mxu(ix, wv2), gate * mxu(iy, wv2), gate * mxu(iz, wv2)

    s = h_ref[...]                       # (tn, S)  bf16
    vx = v_ref[0]                        # (tn, V)  bf16 x-plane
    vy = v_ref[1]
    vz = v_ref[2]

    # ---- gvp[0] : GVPerceptronVN = GVLinear + VN-LeakyReLU + LeakyReLU ----
    s, vx, vy, vz = gv_linear(s, vx, vy, vz, I_L1_WV1, I_L1_WV2, I_L1_WSN,
                              I_L1_WSS, I_L1_WG, I_L1_BG)
    wd = wt(I_L1_WD)
    dx = mxu(vx, wd)
    dy = mxu(vy, wd)
    dz = mxu(vz, wd)
    dotp = vx * dx + vy * dy + vz * dz
    dns = dx * dx + dy * dy + dz * dz
    # x_out = x - (1-slope)*(dot<0)*(dot/(dns+eps))*d   (algebraic simplification)
    coef = jnp.where(dotp >= 0, 0.0,
                     (1.0 - SLOPE) * dotp * pl.reciprocal(dns + EPS, approx=True))
    vx = vx - coef * dx
    vy = vy - coef * dy
    vz = vz - coef * dz
    s = jnp.where(s >= 0, s, SLOPE * s)

    # ---- gvp[1] : GVLinear ----
    s, vx, vy, vz = gv_linear(s, vx, vy, vz, I_L2_WV1, I_L2_WV2, I_L2_WSN,
                              I_L2_WSS, I_L2_WG, I_L2_BG)

    # ---- fused mu / logsigma / pi heads (block-diagonal weights) ----
    head_s, hvx, hvy, hvz = gv_linear(s, vx, vy, vz, I_HD_WV1, I_HD_WV2,
                                      I_HD_WSN, I_HD_WSS, I_HD_WG, I_HD_BG)

    # hv* columns: [0:K] = mu, [K:2K] = logsigma -> exp only the sigma slice.
    out_ref[:, 0 * k:1 * k] = hvx[:, 0:k]
    out_ref[:, 1 * k:2 * k] = jnp.exp(hvx[:, k:2 * k])
    out_ref[:, 2 * k:3 * k] = hvy[:, 0:k]
    out_ref[:, 3 * k:4 * k] = jnp.exp(hvy[:, k:2 * k])
    out_ref[:, 4 * k:5 * k] = hvz[:, 0:k]
    out_ref[:, 5 * k:6 * k] = jnp.exp(hvz[:, k:2 * k])

    # pi head: softmax over the packed logits, head_s columns [2K:3K]
    logits = head_s[:, 2 * k:3 * k]
    logits = logits - jnp.max(logits, axis=-1, keepdims=True)
    e = jnp.exp(logits)
    out_ref[:, 6 * k:7 * k] = e * pl.reciprocal(
        jnp.sum(e, axis=-1, keepdims=True), approx=True)


# ------------------------- parameter construction ---------------------------
def init_params(key, in_sca, in_vec, num_filters, n_component):
    """Deterministic synthetic raw weights, stored pre-transposed (in, out)."""
    F0, F1 = num_filters
    K = n_component
    keys = iter(jax.random.split(key, 32))

    def lin(d_in, d_out, scale=0.2):
        return jax.random.normal(next(keys), (d_in, d_out), jnp.float32) * scale

    h1 = max(in_vec, F1)       # gvp[0] GVLinear hidden
    h2 = F1                    # gvp[1] GVLinear hidden
    hm = max(F1, K)            # mu / logsigma hidden
    hp = max(F1, 1)            # pi hidden

    raw = (
        # gvp[0] GVPerceptronVN
        lin(in_vec, h1), lin(h1, F1), lin(F0, F1),
        jax.random.normal(next(keys), (1, F1), jnp.float32) * 0.2,
        lin(h1 + in_sca, F0), lin(F1, F1),
        # gvp[1] GVLinear
        lin(F1, h2), lin(h2, F1), lin(F0, F1),
        jax.random.normal(next(keys), (1, F1), jnp.float32) * 0.2,
        lin(h2 + F0, F0),
        # mu_net
        lin(F1, hm), lin(hm, K), lin(K, K),
        jax.random.normal(next(keys), (1, K), jnp.float32) * 0.2,
        lin(hm + F0, K),
        # logsigma_net
        lin(F1, hm), lin(hm, K), lin(K, K),
        jax.random.normal(next(keys), (1, K), jnp.float32) * 0.2,
        lin(hm + F0, K),
        # pi_net (only the scalar branch is needed by forward)
        lin(F1, hp), lin(hp + F0, K),
    )
    return raw


def pack_params(raw, n_component):
    """Fuse heads and pack every weight into ONE (R, 128) f32 slab.

    Returns (slab, layout) where layout[i] = (row_offset, rows, cols) for the
    i-th weight (order given by the I_* constants). Row offsets are 8-aligned
    so the kernel's static sub-views are well-behaved.
    """
    (g1_Wv1, g1_Wv2, g1_Wg, g1_bg, g1_Ws, g1_Wd,
     g2_Wv1, g2_Wv2, g2_Wg, g2_bg, g2_Ws,
     mu_Wv1, mu_Wv2, mu_Wg, mu_bg, mu_Ws,
     sg_Wv1, sg_Wv2, sg_Wg, sg_bg, sg_Ws,
     pi_Wv1, pi_Ws) = raw
    K = n_component
    h1 = g1_Wv1.shape[1]
    h2 = g2_Wv1.shape[1]
    hm = mu_Wv1.shape[1]
    hp = pi_Wv1.shape[1]

    # split the [norm | scalar] weight so the kernel never lane-concats
    l1_Wsn, l1_Wss = g1_Ws[:h1], g1_Ws[h1:]
    l2_Wsn, l2_Wss = g2_Ws[:h2], g2_Ws[h2:]
    mu_Wsn, mu_Wss = mu_Ws[:hm], mu_Ws[hm:]
    sg_Wsn, sg_Wss = sg_Ws[:hm], sg_Ws[hm:]
    pi_Wsn, pi_Wss = pi_Ws[:hp], pi_Ws[hp:]

    # fused heads: [mu | logsigma | pi] along the output-lane axis,
    # block-diagonal where the inputs differ per head.
    Hd = 2 * hm + hp
    hd_Wv1 = jnp.concatenate([mu_Wv1, sg_Wv1, pi_Wv1], axis=1)       # (F1, Hd)

    hd_Wsn = jnp.zeros((Hd, 3 * K), jnp.float32)
    hd_Wsn = hd_Wsn.at[0:hm, 0:K].set(mu_Wsn)
    hd_Wsn = hd_Wsn.at[hm:2 * hm, K:2 * K].set(sg_Wsn)
    hd_Wsn = hd_Wsn.at[2 * hm:2 * hm + hp, 2 * K:3 * K].set(pi_Wsn)

    hd_Wss = jnp.concatenate([mu_Wss, sg_Wss, pi_Wss], axis=1)       # (F0, 3K)

    hd_Wv2 = jnp.zeros((Hd, 2 * K), jnp.float32)
    hd_Wv2 = hd_Wv2.at[0:hm, 0:K].set(mu_Wv2)
    hd_Wv2 = hd_Wv2.at[hm:2 * hm, K:2 * K].set(sg_Wv2)

    hd_Wg = jnp.zeros((3 * K, 2 * K), jnp.float32)
    hd_Wg = hd_Wg.at[0:K, 0:K].set(mu_Wg)
    hd_Wg = hd_Wg.at[K:2 * K, K:2 * K].set(sg_Wg)

    hd_bg = jnp.concatenate([mu_bg, sg_bg], axis=1)                  # (1, 2K)

    mats = (g1_Wv1, g1_Wv2, l1_Wsn, l1_Wss, g1_Wg, g1_bg, g1_Wd,
            g2_Wv1, g2_Wv2, l2_Wsn, l2_Wss, g2_Wg, g2_bg,
            hd_Wv1, hd_Wsn, hd_Wss, hd_Wv2, hd_Wg, hd_bg)

    lane_w = max(128, _round_up(max(m.shape[1] for m in mats), 128))
    layout = []
    off = 0
    for m in mats:
        r, c = m.shape
        layout.append((off, r, c))
        off += _round_up(r, 8)
    R = _round_up(off, 8)
    slab = jnp.zeros((R, lane_w), jnp.float32)
    for (o, r, c), m in zip(layout, mats):
        slab = slab.at[o:o + r, 0:c].set(m.astype(jnp.float32))
    return slab, tuple(layout)


# ------------------------------- wrapper -------------------------------------
@functools.partial(jax.jit, static_argnums=(5, 6))
def position_predictor_forward(h_compose, vec_compose, focal_index, pos_compose,
                               w_slab, layout, n_component):
    # glue: focal-row gather stays in XLA.
    # TODO(synk): at production N the gather could be fused into the pipeline
    # (PrefetchScalarGridSpec + per-tile row-gather DMAs from pl.ANY refs); for
    # small/medium N the XLA gather is cheaper than per-row DMA descriptors.
    h = h_compose[focal_index]                                   # (N, S)
    vec = vec_compose[focal_index]                               # (N, V, 3)
    pos = pos_compose[focal_index].astype(jnp.float32)           # (N, 3)

    N, S = h.shape
    V = vec.shape[1]
    K = n_component

    # Tile selection: fat tiles amortize the ~0.35us per-grid-step overhead;
    # TN ~ N/2 (capped at 1024) keeps >= 2 "parallel" steps for the two v7x
    # TensorCores once N > TN_min. Multiples of 16 keep bf16 blocks aligned to
    # the packed (16, 128) sublane tiling.
    # NOTE: TN depends on N, so distinct focal counts recompile; bucket N in
    # serving if that matters.
    TN = min(1024, _round_up(max(1, -(-N // 2)), 16))
    Np = _round_up(N, TN)
    nt = Np // TN
    pad = Np - N

    # bf16 activations: halves HBM/VMEM traffic and feeds the bf16 MXU path.
    h = h.astype(jnp.bfloat16)
    # single host transpose (N, V, 3) -> (3, N, V); no per-tile interleave.
    vplanes = jnp.transpose(vec, (2, 0, 1)).astype(jnp.bfloat16)
    if pad:
        h = jnp.pad(h, ((0, pad), (0, 0)))
        vplanes = jnp.pad(vplanes, ((0, 0), (0, pad), (0, 0)))

    kernel = functools.partial(position_predictor_kernel,
                               layout=layout, n_component=K)

    matmul_terms = sum(r * c for _, r, c in layout)
    cost = pl.CostEstimate(
        flops=int(2 * Np * 3 * matmul_terms),
        transcendentals=int(Np * 16 * K),
        bytes_accessed=int(h.size * 2 + vplanes.size * 2 +
                           w_slab.size * 4 + Np * 7 * K * 4),
    )

    out = pl.pallas_call(
        kernel,
        grid=(nt,),
        in_specs=[
            pl.BlockSpec((TN, S), lambda i: (i, 0)),
            pl.BlockSpec((3, TN, V), lambda i: (0, i, 0)),
            # one weight slab; constant block index -> fetched once, resident
            pl.BlockSpec(w_slab.shape, lambda i: (0, 0)),
        ],
        out_specs=pl.BlockSpec((TN, 7 * K), lambda i: (i, 0)),
        out_shape=jax.ShapeDtypeStruct((Np, 7 * K), jnp.float32),
        compiler_params=pltpu.CompilerParams(
            dimension_semantics=("parallel",),
            vmem_limit_bytes=32 * 1024 * 1024),
        cost_estimate=cost,
    )(h, vplanes, w_slab)

    out = out[:N]
    # column layout: [x: mu|sigma (2K)] [y: 2K] [z: 2K] [pi (K)]
    planes = out[:, :6 * K].reshape(N, 3, 2 * K)
    relative_mu = jnp.transpose(planes[:, :, :K], (0, 2, 1))         # (N, K, 3)
    sigma = jnp.transpose(planes[:, :, K:2 * K], (0, 2, 1))          # (N, K, 3)
    pi = out[:, 6 * K:]                                              # (N, K)
    abs_mu = relative_mu + pos[:, None, :]
    return relative_mu, abs_mu, sigma, pi


# ---------------- pure-JAX reference (for correctness check) -----------------
def _ref_gvlinear(s, v, Wv1, Wv2, Wg, bg, Ws):
    vint = jnp.einsum('ncd,ch->nhd', v, Wv1)
    norm = jnp.sqrt(jnp.sum(vint * vint, axis=-1))
    out_s = jnp.concatenate([norm, s], axis=-1) @ Ws
    out_v = jnp.einsum('nhd,ho->nod', vint, Wv2)
    gate = jax.nn.sigmoid(out_s @ Wg + bg)
    return out_s, gate[:, :, None] * out_v


def _ref_forward(h_compose, vec_compose, focal_index, pos_compose, raw, K):
    (g1_Wv1, g1_Wv2, g1_Wg, g1_bg, g1_Ws, g1_Wd,
     g2_Wv1, g2_Wv2, g2_Wg, g2_bg, g2_Ws,
     mu_Wv1, mu_Wv2, mu_Wg, mu_bg, mu_Ws,
     sg_Wv1, sg_Wv2, sg_Wg, sg_bg, sg_Ws,
     pi_Wv1, pi_Ws) = raw
    s = h_compose[focal_index].astype(jnp.float32)
    v = vec_compose[focal_index].astype(jnp.float32)
    pos = pos_compose[focal_index].astype(jnp.float32)

    s, v = _ref_gvlinear(s, v, g1_Wv1, g1_Wv2, g1_Wg, g1_bg, g1_Ws)
    d = jnp.einsum('ncd,ch->nhd', v, g1_Wd)
    dotp = jnp.sum(v * d, axis=-1, keepdims=True)
    dns = jnp.sum(d * d, axis=-1, keepdims=True)
    mask = (dotp >= 0).astype(v.dtype)
    v = SLOPE * v + (1 - SLOPE) * (mask * v + (1 - mask) * (v - (dotp / (dns + EPS)) * d))
    s = jnp.where(s >= 0, s, SLOPE * s)

    s, v = _ref_gvlinear(s, v, g2_Wv1, g2_Wv2, g2_Wg, g2_bg, g2_Ws)
    _, rel_mu = _ref_gvlinear(s, v, mu_Wv1, mu_Wv2, mu_Wg, mu_bg, mu_Ws)
    _, logsig = _ref_gvlinear(s, v, sg_Wv1, sg_Wv2, sg_Wg, sg_bg, sg_Ws)
    sigma = jnp.exp(logsig)
    vint = jnp.einsum('ncd,ch->nhd', v, pi_Wv1)
    norm = jnp.sqrt(jnp.sum(vint * vint, axis=-1))
    pi = jax.nn.softmax(jnp.concatenate([norm, s], axis=-1) @ pi_Ws, axis=1)
    abs_mu = rel_mu + pos[:, None, :]
    return rel_mu, abs_mu, sigma, pi


if __name__ == "__main__":
    # small, module-consistent shapes
    in_sca, in_vec = 16, 8
    num_filters = (32, 16)
    n_component = 4
    n_compose, n_focal = 16, 8

    key = jax.random.PRNGKey(0)
    k_h, k_v, k_p, k_w = jax.random.split(key, 4)
    h_compose = jax.random.normal(k_h, (n_compose, in_sca), jnp.float32)
    vec_compose = jax.random.normal(k_v, (n_compose, in_vec, 3), jnp.float32)
    pos_compose = jax.random.normal(k_p, (n_compose, 3), jnp.float32)
    focal_index = jnp.array([0, 3, 5, 7, 8, 10, 12, 15], dtype=jnp.int32)

    raw_params = init_params(k_w, in_sca, in_vec, num_filters, n_component)
    w_slab, layout = pack_params(raw_params, n_component)

    rel_mu, abs_mu, sigma, pi = position_predictor_forward(
        h_compose, vec_compose, focal_index, pos_compose, w_slab, layout,
        n_component)
    jax.block_until_ready((rel_mu, abs_mu, sigma, pi))

    # correctness check against a pure-f32 JAX reference of the same math
    r_mu, r_abs, r_sig, r_pi = _ref_forward(
        h_compose, vec_compose, focal_index, pos_compose, raw_params, n_component)
    assert rel_mu.shape == (n_focal, n_component, 3)
    assert abs_mu.shape == (n_focal, n_component, 3)
    assert sigma.shape == (n_focal, n_component, 3)
    assert pi.shape == (n_focal, n_component)
    # bf16 MXU operands + approx reciprocals -> looser tolerance than pure f32
    for a, b in ((rel_mu, r_mu), (abs_mu, r_abs), (sigma, r_sig), (pi, r_pi)):
        assert jnp.allclose(a, b, atol=5e-2, rtol=5e-2), "mismatch vs reference"
    assert jnp.allclose(jnp.sum(pi, axis=-1), 1.0, atol=1e-2), "pi not normalized"

    print("KERNEL_OK")
</pallas_src>

<mosaic_0001>
module attributes {stable_mosaic.version = 11 : i64} {
  func.func @position_predictor_kernel(%arg0: i32, %arg1: memref<16x16xbf16, #tpu.memory_space<vmem>>, %arg2: memref<3x16x8xbf16, #tpu.memory_space<vmem>>, %arg3: memref<400x128xf32, #tpu.memory_space<vmem>>, %arg4: memref<16x28xf32, #tpu.memory_space<vmem>>) attributes {dimension_semantics = [#tpu.dimension_semantics<parallel>], iteration_bounds = array<i64: 1>, scalar_prefetch = 0 : i64, scratch_operands = 0 : i64, tpu.core_type = #tpu.core_type<tc>, window_params = [{transform_indices = @transform_0, window_bounds = array<i64: 16, 16>}, {transform_indices = @transform_1, window_bounds = array<i64: 3, 16, 8>}, {pipeline_mode = #tpu.pipeline_mode<synchronous>, transform_indices = @transform_2, window_bounds = array<i64: 400, 128>}, {transform_indices = @transform_3, window_bounds = array<i64: 16, 28>}]} {
    %c0 = arith.constant 0 : index
    %c0_0 = arith.constant 0 : index
    %0 = vector.load %arg1[%c0, %c0_0] : memref<16x16xbf16, #tpu.memory_space<vmem>>, vector<16x16xbf16>
    %c0_1 = arith.constant 0 : index
    %c0_2 = arith.constant 0 : index
    %c0_3 = arith.constant 0 : index
    %1 = vector.load %arg2[%c0_1, %c0_2, %c0_3] : memref<3x16x8xbf16, #tpu.memory_space<vmem>>, vector<1x16x8xbf16>
    %2 = vector.shape_cast %1 : vector<1x16x8xbf16> to vector<16x8xbf16>
    %c1 = arith.constant 1 : index
    %c0_4 = arith.constant 0 : index
    %c0_5 = arith.constant 0 : index
    %3 = vector.load %arg2[%c1, %c0_4, %c0_5] : memref<3x16x8xbf16, #tpu.memory_space<vmem>>, vector<1x16x8xbf16>
    %4 = vector.shape_cast %3 : vector<1x16x8xbf16> to vector<16x8xbf16>
    %c2 = arith.constant 2 : index
    %c0_6 = arith.constant 0 : index
    %c0_7 = arith.constant 0 : index
    %5 = vector.load %arg2[%c2, %c0_6, %c0_7] : memref<3x16x8xbf16, #tpu.memory_space<vmem>>, vector<1x16x8xbf16>
    %6 = vector.shape_cast %5 : vector<1x16x8xbf16> to vector<16x8xbf16>
    %c0_8 = arith.constant 0 : index
    %c0_9 = arith.constant 0 : index
    %7 = vector.load %arg3[%c0_8, %c0_9] : memref<400x128xf32, #tpu.memory_space<vmem>>, vector<8x16xf32>
    %8 = arith.truncf %7 : vector<8x16xf32> to vector<8x16xbf16>
    %c8 = arith.constant 8 : index
    %c0_10 = arith.constant 0 : index
    %9 = vector.load %arg3[%c8, %c0_10] : memref<400x128xf32, #tpu.memory_space<vmem>>, vector<16x16xf32>
    %10 = arith.truncf %9 : vector<16x16xf32> to vector<16x16xbf16>
    %c24 = arith.constant 24 : index
    %c0_11 = arith.constant 0 : index
    %11 = vector.load %arg3[%c24, %c0_11] : memref<400x128xf32, #tpu.memory_space<vmem>>, vector<16x32xf32>
    %12 = arith.truncf %11 : vector<16x32xf32> to vector<16x32xbf16>
    %c40 = arith.constant 40 : index
    %c0_12 = arith.constant 0 : index
    %13 = vector.load %arg3[%c40, %c0_12] : memref<400x128xf32, #tpu.memory_space<vmem>>, vector<16x32xf32>
    %14 = arith.truncf %13 : vector<16x32xf32> to vector<16x32xbf16>
    %c56 = arith.constant 56 : index
    %c0_13 = arith.constant 0 : index
    %15 = vector.load %arg3[%c56, %c0_13] : memref<400x128xf32, #tpu.memory_space<vmem>>, vector<32x16xf32>
    %16 = arith.truncf %15 : vector<32x16xf32> to vector<32x16xbf16>
    %c88 = arith.constant 88 : index
    %c0_14 = arith.constant 0 : index
    %17 = vector.load %arg3[%c88, %c0_14] : memref<400x128xf32, #tpu.memory_space<vmem>>, vector<1x16xf32>
    %cst = arith.constant dense<0.000000e+00> : vector<16x16xf32>
    %18 = tpu.matmul %2, %8, %cst {dimension_numbers = #tpu.dot_dimension_numbers<[1], [0], [0], [1], [0, 0, 1, 1], [], []>} : vector<16x8xbf16>, vector<8x16xbf16>, vector<16x16xf32> -> vector<16x16xf32>
    %cst_15 = arith.constant dense<0.000000e+00> : vector<16x16xf32>
    %19 = tpu.matmul %4, %8, %cst_15 {dimension_numbers = #tpu.dot_dimension_numbers<[1], [0], [0], [1], [0, 0, 1, 1], [], []>} : vector<16x8xbf16>, vector<8x16xbf16>, vector<16x16xf32> -> vector<16x16xf32>
    %cst_16 = arith.constant dense<0.000000e+00> : vector<16x16xf32>
    %20 = tpu.matmul %6, %8, %cst_16 {dimension_numbers = #tpu.dot_dimension_numbers<[1], [0], [0], [1], [0, 0, 1, 1], [], []>} : vector<16x8xbf16>, vector<8x16xbf16>, vector<16x16xf32> -> vector<16x16xf32>
    %21 = arith.mulf %18, %18 : vector<16x16xf32>
    %22 = arith.mulf %19, %19 : vector<16x16xf32>
    %23 = arith.addf %21, %22 : vector<16x16xf32>
    %24 = arith.mulf %20, %20 : vector<16x16xf32>
    %25 = arith.addf %23, %24 : vector<16x16xf32>
    %26 = math.sqrt %25 : vector<16x16xf32>
    %27 = arith.truncf %26 : vector<16x16xf32> to vector<16x16xbf16>
    %cst_17 = arith.constant dense<0.000000e+00> : vector<16x32xf32>
    %28 = tpu.matmul %27, %12, %cst_17 {dimension_numbers = #tpu.dot_dimension_numbers<[1], [0], [0], [1], [0, 0, 1, 1], [], []>} : vector<16x16xbf16>, vector<16x32xbf16>, vector<16x32xf32> -> vector<16x32xf32>
    %cst_18 = arith.constant dense<0.000000e+00> : vector<16x32xf32>
    %29 = tpu.matmul %0, %14, %cst_18 {dimension_numbers = #tpu.dot_dimension_numbers<[1], [0], [0], [1], [0, 0, 1, 1], [], []>} : vector<16x16xbf16>, vector<16x32xbf16>, vector<16x32xf32> -> vector<16x32xf32>
    %30 = arith.addf %28, %29 : vector<16x32xf32>
    %31 = arith.truncf %30 : vector<16x32xf32> to vector<16x32xbf16>
    %cst_19 = arith.constant dense<0.000000e+00> : vector<16x16xf32>
    %32 = tpu.matmul %31, %16, %cst_19 {dimension_numbers = #tpu.dot_dimension_numbers<[1], [0], [0], [1], [0, 0, 1, 1], [], []>} : vector<16x32xbf16>, vector<32x16xbf16>, vector<16x16xf32> -> vector<16x16xf32>
    %33 = vector.broadcast %17 : vector<1x16xf32> to vector<16x16xf32>
    %34 = arith.addf %32, %33 : vector<16x16xf32>
    %35 = arith.negf %34 : vector<16x16xf32>
    %36 = math.exp %35 : vector<16x16xf32>
    %cst_20 = arith.constant 1.000000e+00 : f32
    %37 = vector.broadcast %cst_20 : f32 to vector<16x16xf32>
    %38 = arith.addf %37, %36 : vector<16x16xf32>
    %39 = arith.divf %37, %38 : vector<16x16xf32>
    %40 = arith.truncf %18 : vector<16x16xf32> to vector<16x16xbf16>
    %cst_21 = arith.constant dense<0.000000e+00> : vector<16x16xf32>
    %41 = tpu.matmul %40, %10, %cst_21 {dimension_numbers = #tpu.dot_dimension_numbers<[1], [0], [0], [1], [0, 0, 1, 1], [], []>} : vector<16x16xbf16>, vector<16x16xbf16>, vector<16x16xf32> -> vector<16x16xf32>
    %42 = arith.mulf %39, %41 : vector<16x16xf32>
    %43 = arith.truncf %19 : vector<16x16xf32> to vector<16x16xbf16>
    %cst_22 = arith.constant dense<0.000000e+00> : vector<16x16xf32>
    %44 = tpu.matmul %43, %10, %cst_22 {dimension_numbers = #tpu.dot_dimension_numbers<[1], [0], [0], [1], [0, 0, 1, 1], [], []>} : vector<16x16xbf16>, vector<16x16xbf16>, vector<16x16xf32> -> vector<16x16xf32>
    %45 = arith.mulf %39, %44 : vector<16x16xf32>
    %46 = arith.truncf %20 : vector<16x16xf32> to vector<16x16xbf16>
    %cst_23 = arith.constant dense<0.000000e+00> : vector<16x16xf32>
    %47 = tpu.matmul %46, %10, %cst_23 {dimension_numbers = #tpu.dot_dimension_numbers<[1], [0], [0], [1], [0, 0, 1, 1], [], []>} : vector<16x16xbf16>, vector<16x16xbf16>, vector<16x16xf32> -> vector<16x16xf32>
    %48 = arith.mulf %39, %47 : vector<16x16xf32>
    %c96 = arith.constant 96 : index
    %c0_24 = arith.constant 0 : index
    %49 = vector.load %arg3[%c96, %c0_24] : memref<400x128xf32, #tpu.memory_space<vmem>>, vector<16x16xf32>
    %50 = arith.truncf %49 : vector<16x16xf32> to vector<16x16xbf16>
    %51 = arith.truncf %42 : vector<16x16xf32> to vector<16x16xbf16>
    %cst_25 = arith.constant dense<0.000000e+00> : vector<16x16xf32>
    %52 = tpu.matmul %51, %50, %cst_25 {dimension_numbers = #tpu.dot_dimension_numbers<[1], [0], [0], [1], [0, 0, 1, 1], [], []>} : vector<16x16xbf16>, vector<16x16xbf16>, vector<16x16xf32> -> vector<16x16xf32>
    %53 = arith.truncf %45 : vector<16x16xf32> to vector<16x16xbf16>
    %cst_26 = arith.constant dense<0.000000e+00> : vector<16x16xf32>
    %54 = tpu.matmul %53, %50, %cst_26 {dimension_numbers = #tpu.dot_dimension_numbers<[1], [0], [0], [1], [0, 0, 1, 1], [], []>} : vector<16x16xbf16>, vector<16x16xbf16>, vector<16x16xf32> -> vector<16x16xf32>
    %55 = arith.truncf %48 : vector<16x16xf32> to vector<16x16xbf16>
    %cst_27 = arith.constant dense<0.000000e+00> : vector<16x16xf32>
    %56 = tpu.matmul %55, %50, %cst_27 {dimension_numbers = #tpu.dot_dimension_numbers<[1], [0], [0], [1], [0, 0, 1, 1], [], []>} : vector<16x16xbf16>, vector<16x16xbf16>, vector<16x16xf32> -> vector<16x16xf32>
    %57 = arith.mulf %42, %52 : vector<16x16xf32>
    %58 = arith.mulf %45, %54 : vector<16x16xf32>
    %59 = arith.addf %57, %58 : vector<16x16xf32>
    %60 = arith.mulf %48, %56 : vector<16x16xf32>
    %61 = arith.addf %59, %60 : vector<16x16xf32>
    %62 = arith.mulf %52, %52 : vector<16x16xf32>
    %63 = arith.mulf %54, %54 : vector<16x16xf32>
    %64 = arith.addf %62, %63 : vector<16x16xf32>
    %65 = arith.mulf %56, %56 : vector<16x16xf32>
    %66 = arith.addf %64, %65 : vector<16x16xf32>
    %cst_28 = arith.constant 0.000000e+00 : f32
    %67 = vector.broadcast %cst_28 : f32 to vector<16x16xf32>
    %68 = arith.cmpf oge, %61, %67 : vector<16x16xf32>
    %cst_29 = arith.constant 9.900000e-01 : f32
    %69 = vector.broadcast %cst_29 : f32 to vector<16x16xf32>
    %70 = arith.mulf %69, %61 : vector<16x16xf32>
    %cst_30 = arith.constant 9.99999997E-7 : f32
    %71 = vector.broadcast %cst_30 : f32 to vector<16x16xf32>
    %72 = arith.addf %66, %71 : vector<16x16xf32>
    %73 = tpu.reciprocal %72 {approx = true} : vector<16x16xf32> -> vector<16x16xf32>
    %74 = arith.mulf %70, %73 : vector<16x16xf32>
    %cst_31 = arith.constant 0.000000e+00 : f32
    %75 = vector.broadcast %cst_31 : f32 to vector<16x16xf32>
    %76 = arith.select %68, %75, %74 : vector<16x16xi1>, vector<16x16xf32>
    %77 = arith.mulf %76, %52 : vector<16x16xf32>
    %78 = arith.subf %42, %77 : vector<16x16xf32>
    %79 = arith.mulf %76, %54 : vector<16x16xf32>
    %80 = arith.subf %45, %79 : vector<16x16xf32>
    %81 = arith.mulf %76, %56 : vector<16x16xf32>
    %82 = arith.subf %48, %81 : vector<16x16xf32>
    %cst_32 = arith.constant 0.000000e+00 : f32
    %83 = vector.broadcast %cst_32 : f32 to vector<16x32xf32>
    %84 = arith.cmpf oge, %30, %83 : vector<16x32xf32>
    %cst_33 = arith.constant 0.00999999977 : f32
    %85 = vector.broadcast %cst_33 : f32 to vector<16x32xf32>
    %86 = arith.mulf %85, %30 : vector<16x32xf32>
    %87 = arith.select %84, %30, %86 : vector<16x32xi1>, vector<16x32xf32>
    %c112 = arith.constant 112 : index
    %c0_34 = arith.constant 0 : index
    %88 = vector.load %arg3[%c112, %c0_34] : memref<400x128xf32, #tpu.memory_space<vmem>>, vector<16x16xf32>
    %89 = arith.truncf %88 : vector<16x16xf32> to vector<16x16xbf16>
    %c128 = arith.constant 128 : index
    %c0_35 = arith.constant 0 : index
    %90 = vector.load %arg3[%c128, %c0_35] : memref<400x128xf32, #tpu.memory_space<vmem>>, vector<16x16xf32>
    %91 = arith.truncf %90 : vector<16x16xf32> to vector<16x16xbf16>
    %c144 = arith.constant 144 : index
    %c0_36 = arith.constant 0 : index
    %92 = vector.load %arg3[%c144, %c0_36] : memref<400x128xf32, #tpu.memory_space<vmem>>, vector<16x32xf32>
    %93 = arith.truncf %92 : vector<16x32xf32> to vector<16x32xbf16>
    %c160 = arith.constant 160 : index
    %c0_37 = arith.constant 0 : index
    %94 = vector.load %arg3[%c160, %c0_37] : memref<400x128xf32, #tpu.memory_space<vmem>>, vector<32x32xf32>
    %95 = arith.truncf %94 : vector<32x32xf32> to vector<32x32xbf16>
    %c192 = arith.constant 192 : index
    %c0_38 = arith.constant 0 : index
    %96 = vector.load %arg3[%c192, %c0_38] : memref<400x128xf32, #tpu.memory_space<vmem>>, vector<32x16xf32>
    %97 = arith.truncf %96 : vector<32x16xf32> to vector<32x16xbf16>
    %c224 = arith.constant 224 : index
    %c0_39 = arith.constant 0 : index
    %98 = vector.load %arg3[%c224, %c0_39] : memref<400x128xf32, #tpu.memory_space<vmem>>, vector<1x16xf32>
    %99 = arith.truncf %78 : vector<16x16xf32> to vector<16x16xbf16>
    %cst_40 = arith.constant dense<0.000000e+00> : vector<16x16xf32>
    %100 = tpu.matmul %99, %89, %cst_40 {dimension_numbers = #tpu.dot_dimension_numbers<[1], [0], [0], [1], [0, 0, 1, 1], [], []>} : vector<16x16xbf16>, vector<16x16xbf16>, vector<16x16xf32> -> vector<16x16xf32>
    %101 = arith.truncf %80 : vector<16x16xf32> to vector<16x16xbf16>
    %cst_41 = arith.constant dense<0.000000e+00> : vector<16x16xf32>
    %102 = tpu.matmul %101, %89, %cst_41 {dimension_numbers = #tpu.dot_dimension_numbers<[1], [0], [0], [1], [0, 0, 1, 1], [], []>} : vector<16x16xbf16>, vector<16x16xbf16>, vector<16x16xf32> -> vector<16x16xf32>
    %103 = arith.truncf %82 : vector<16x16xf32> to vector<16x16xbf16>
    %cst_42 = arith.constant dense<0.000000e+00> : vector<16x16xf32>
    %104 = tpu.matmul %103, %89, %cst_42 {dimension_numbers = #tpu.dot_dimension_numbers<[1], [0], [0], [1], [0, 0, 1, 1], [], []>} : vector<16x16xbf16>, vector<16x16xbf16>, vector<16x16xf32> -> vector<16x16xf32>
    %105 = arith.mulf %100, %100 : vector<16x16xf32>
    %106 = arith.mulf %102, %102 : vector<16x16xf32>
    %107 = arith.addf %105, %106 : vector<16x16xf32>
    %108 = arith.mulf %104, %104 : vector<16x16xf32>
    %109 = arith.addf %107, %108 : vector<16x16xf32>
    %110 = math.sqrt %109 : vector<16x16xf32>
    %111 = arith.truncf %110 : vector<16x16xf32> to vector<16x16xbf16>
    %cst_43 = arith.constant dense<0.000000e+00> : vector<16x32xf32>
    %112 = tpu.matmul %111, %93, %cst_43 {dimension_numbers = #tpu.dot_dimension_numbers<[1], [0], [0], [1], [0, 0, 1, 1], [], []>} : vector<16x16xbf16>, vector<16x32xbf16>, vector<16x32xf32> -> vector<16x32xf32>
    %113 = arith.truncf %87 : vector<16x32xf32> to vector<16x32xbf16>
    %cst_44 = arith.constant dense<0.000000e+00> : vector<16x32xf32>
    %114 = tpu.matmul %113, %95, %cst_44 {dimension_numbers = #tpu.dot_dimension_numbers<[1], [0], [0], [1], [0, 0, 1, 1], [], []>} : vector<16x32xbf16>, vector<32x32xbf16>, vector<16x32xf32> -> vector<16x32xf32>
    %115 = arith.addf %112, %114 : vector<16x32xf32>
    %116 = arith.truncf %115 : vector<16x32xf32> to vector<16x32xbf16>
    %cst_45 = arith.constant dense<0.000000e+00> : vector<16x16xf32>
    %117 = tpu.matmul %116, %97, %cst_45 {dimension_numbers = #tpu.dot_dimension_numbers<[1], [0], [0], [1], [0, 0, 1, 1], [], []>} : vector<16x32xbf16>, vector<32x16xbf16>, vector<16x16xf32> -> vector<16x16xf32>
    %118 = vector.broadcast %98 : vector<1x16xf32> to vector<16x16xf32>
    %119 = arith.addf %117, %118 : vector<16x16xf32>
    %120 = arith.negf %119 : vector<16x16xf32>
    %121 = math.exp %120 : vector<16x16xf32>
    %cst_46 = arith.constant 1.000000e+00 : f32
    %122 = vector.broadcast %cst_46 : f32 to vector<16x16xf32>
    %123 = arith.addf %122, %121 : vector<16x16xf32>
    %124 = arith.divf %122, %123 : vector<16x16xf32>
    %125 = arith.truncf %100 : vector<16x16xf32> to vector<16x16xbf16>
    %cst_47 = arith.constant dense<0.000000e+00> : vector<16x16xf32>
    %126 = tpu.matmul %125, %91, %cst_47 {dimension_numbers = #tpu.dot_dimension_numbers<[1], [0], [0], [1], [0, 0, 1, 1], [], []>} : vector<16x16xbf16>, vector<16x16xbf16>, vector<16x16xf32> -> vector<16x16xf32>
    %127 = arith.mulf %124, %126 : vector<16x16xf32>
    %128 = arith.truncf %102 : vector<16x16xf32> to vector<16x16xbf16>
    %cst_48 = arith.constant dense<0.000000e+00> : vector<16x16xf32>
    %129 = tpu.matmul %128, %91, %cst_48 {dimension_numbers = #tpu.dot_dimension_numbers<[1], [0], [0], [1], [0, 0, 1, 1], [], []>} : vector<16x16xbf16>, vector<16x16xbf16>, vector<16x16xf32> -> vector<16x16xf32>
    %130 = arith.mulf %124, %129 : vector<16x16xf32>
    %131 = arith.truncf %104 : vector<16x16xf32> to vector<16x16xbf16>
    %cst_49 = arith.constant dense<0.000000e+00> : vector<16x16xf32>
    %132 = tpu.matmul %131, %91, %cst_49 {dimension_numbers = #tpu.dot_dimension_numbers<[1], [0], [0], [1], [0, 0, 1, 1], [], []>} : vector<16x16xbf16>, vector<16x16xbf16>, vector<16x16xf32> -> vector<16x16xf32>
    %133 = arith.mulf %124, %132 : vector<16x16xf32>
    %c232 = arith.constant 232 : index
    %c0_50 = arith.constant 0 : index
    %134 = vector.load %arg3[%c232, %c0_50] : memref<400x128xf32, #tpu.memory_space<vmem>>, vector<16x48xf32>
    %135 = arith.truncf %134 : vector<16x48xf32> to vector<16x48xbf16>
    %c328 = arith.constant 328 : index
    %c0_51 = arith.constant 0 : index
    %136 = vector.load %arg3[%c328, %c0_51] : memref<400x128xf32, #tpu.memory_space<vmem>>, vector<48x8xf32>
    %137 = arith.truncf %136 : vector<48x8xf32> to vector<48x8xbf16>
    %c248 = arith.constant 248 : index
    %c0_52 = arith.constant 0 : index
    %138 = vector.load %arg3[%c248, %c0_52] : memref<400x128xf32, #tpu.memory_space<vmem>>, vector<48x12xf32>
    %139 = arith.truncf %138 : vector<48x12xf32> to vector<48x12xbf16>
    %c296 = arith.constant 296 : index
    %c0_53 = arith.constant 0 : index
    %140 = vector.load %arg3[%c296, %c0_53] : memref<400x128xf32, #tpu.memory_space<vmem>>, vector<32x12xf32>
    %141 = arith.truncf %140 : vector<32x12xf32> to vector<32x12xbf16>
    %c376 = arith.constant 376 : index
    %c0_54 = arith.constant 0 : index
    %142 = vector.load %arg3[%c376, %c0_54] : memref<400x128xf32, #tpu.memory_space<vmem>>, vector<12x8xf32>
    %143 = arith.truncf %142 : vector<12x8xf32> to vector<12x8xbf16>
    %c392 = arith.constant 392 : index
    %c0_55 = arith.constant 0 : index
    %144 = vector.load %arg3[%c392, %c0_55] : memref<400x128xf32, #tpu.memory_space<vmem>>, vector<1x8xf32>
    %145 = arith.truncf %127 : vector<16x16xf32> to vector<16x16xbf16>
    %cst_56 = arith.constant dense<0.000000e+00> : vector<16x48xf32>
    %146 = tpu.matmul %145, %135, %cst_56 {dimension_numbers = #tpu.dot_dimension_numbers<[1], [0], [0], [1], [0, 0, 1, 1], [], []>} : vector<16x16xbf16>, vector<16x48xbf16>, vector<16x48xf32> -> vector<16x48xf32>
    %147 = arith.truncf %130 : vector<16x16xf32> to vector<16x16xbf16>
    %cst_57 = arith.constant dense<0.000000e+00> : vector<16x48xf32>
    %148 = tpu.matmul %147, %135, %cst_57 {dimension_numbers = #tpu.dot_dimension_numbers<[1], [0], [0], [1], [0, 0, 1, 1], [], []>} : vector<16x16xbf16>, vector<16x48xbf16>, vector<16x48xf32> -> vector<16x48xf32>
    %149 = arith.truncf %133 : vector<16x16xf32> to vector<16x16xbf16>
    %cst_58 = arith.constant dense<0.000000e+00> : vector<16x48xf32>
    %150 = tpu.matmul %149, %135, %cst_58 {dimension_numbers = #tpu.dot_dimension_numbers<[1], [0], [0], [1], [0, 0, 1, 1], [], []>} : vector<16x16xbf16>, vector<16x48xbf16>, vector<16x48xf32> -> vector<16x48xf32>
    %151 = arith.mulf %146, %146 : vector<16x48xf32>
    %152 = arith.mulf %148, %148 : vector<16x48xf32>
    %153 = arith.addf %151, %152 : vector<16x48xf32>
    %154 = arith.mulf %150, %150 : vector<16x48xf32>
    %155 = arith.addf %153, %154 : vector<16x48xf32>
    %156 = math.sqrt %155 : vector<16x48xf32>
    %157 = arith.truncf %156 : vector<16x48xf32> to vector<16x48xbf16>
    %cst_59 = arith.constant dense<0.000000e+00> : vector<16x12xf32>
    %158 = tpu.matmul %157, %139, %cst_59 {dimension_numbers = #tpu.dot_dimension_numbers<[1], [0], [0], [1], [0, 0, 1, 1], [], []>} : vector<16x48xbf16>, vector<48x12xbf16>, vector<16x12xf32> -> vector<16x12xf32>
    %159 = arith.truncf %115 : vector<16x32xf32> to vector<16x32xbf16>
    %cst_60 = arith.constant dense<0.000000e+00> : vector<16x12xf32>
    %160 = tpu.matmul %159, %141, %cst_60 {dimension_numbers = #tpu.dot_dimension_numbers<[1], [0], [0], [1], [0, 0, 1, 1], [], []>} : vector<16x32xbf16>, vector<32x12xbf16>, vector<16x12xf32> -> vector<16x12xf32>
    %161 = arith.addf %158, %160 : vector<16x12xf32>
    %162 = arith.truncf %161 : vector<16x12xf32> to vector<16x12xbf16>
    %cst_61 = arith.constant dense<0.000000e+00> : vector<16x8xf32>
    %163 = tpu.matmul %162, %143, %cst_61 {dimension_numbers = #tpu.dot_dimension_numbers<[1], [0], [0], [1], [0, 0, 1, 1], [], []>} : vector<16x12xbf16>, vector<12x8xbf16>, vector<16x8xf32> -> vector<16x8xf32>
    %164 = vector.broadcast %144 : vector<1x8xf32> to vector<16x8xf32>
    %165 = arith.addf %163, %164 : vector<16x8xf32>
    %166 = arith.negf %165 : vector<16x8xf32>
    %167 = math.exp %166 : vector<16x8xf32>
    %cst_62 = arith.constant 1.000000e+00 : f32
    %168 = vector.broadcast %cst_62 : f32 to vector<16x8xf32>
    %169 = arith.addf %168, %167 : vector<16x8xf32>
    %170 = arith.divf %168, %169 : vector<16x8xf32>
    %171 = arith.truncf %146 : vector<16x48xf32> to vector<16x48xbf16>
    %cst_63 = arith.constant dense<0.000000e+00> : vector<16x8xf32>
    %172 = tpu.matmul %171, %137, %cst_63 {dimension_numbers = #tpu.dot_dimension_numbers<[1], [0], [0], [1], [0, 0, 1, 1], [], []>} : vector<16x48xbf16>, vector<48x8xbf16>, vector<16x8xf32> -> vector<16x8xf32>
    %173 = arith.mulf %170, %172 : vector<16x8xf32>
    %174 = arith.truncf %148 : vector<16x48xf32> to vector<16x48xbf16>
    %cst_64 = arith.constant dense<0.000000e+00> : vector<16x8xf32>
    %175 = tpu.matmul %174, %137, %cst_64 {dimension_numbers = #tpu.dot_dimension_numbers<[1], [0], [0], [1], [0, 0, 1, 1], [], []>} : vector<16x48xbf16>, vector<48x8xbf16>, vector<16x8xf32> -> vector<16x8xf32>
    %176 = arith.mulf %170, %175 : vector<16x8xf32>
    %177 = arith.truncf %150 : vector<16x48xf32> to vector<16x48xbf16>
    %cst_65 = arith.constant dense<0.000000e+00> : vector<16x8xf32>
    %178 = tpu.matmul %177, %137, %cst_65 {dimension_numbers = #tpu.dot_dimension_numbers<[1], [0], [0], [1], [0, 0, 1, 1], [], []>} : vector<16x48xbf16>, vector<48x8xbf16>, vector<16x8xf32> -> vector<16x8xf32>
    %179 = arith.mulf %170, %178 : vector<16x8xf32>
    %180 = vector.extract_strided_slice %173 {offsets = [0, 0], sizes = [16, 4], strides = [1, 1]} : vector<16x8xf32> to vector<16x4xf32>
    %c0_66 = arith.constant 0 : index
    %c0_67 = arith.constant 0 : index
    %181 = vector.load %arg4[%c0_66, %c0_67] : memref<16x28xf32, #tpu.memory_space<vmem>>, vector<16x4xf32>
    tpu.vector_store %arg4[%c0_66, %c0_67], %180 {strides = array<i32>} : memref<16x28xf32, #tpu.memory_space<vmem>>, vector<16x4xf32>,
    %182 = vector.extract_strided_slice %173 {offsets = [0, 4], sizes = [16, 4], strides = [1, 1]} : vector<16x8xf32> to vector<16x4xf32>
    %183 = math.exp %182 : vector<16x4xf32>
    %c0_68 = arith.constant 0 : index
    %c4 = arith.constant 4 : index
    %184 = vector.load %arg4[%c0_68, %c4] : memref<16x28xf32, #tpu.memory_space<vmem>>, vector<16x4xf32>
    tpu.vector_store %arg4[%c0_68, %c4], %183 {strides = array<i32>} : memref<16x28xf32, #tpu.memory_space<vmem>>, vector<16x4xf32>,
    %185 = vector.extract_strided_slice %176 {offsets = [0, 0], sizes = [16, 4], strides = [1, 1]} : vector<16x8xf32> to vector<16x4xf32>
    %c0_69 = arith.constant 0 : index
    %c8_70 = arith.constant 8 : index
    %186 = vector.load %arg4[%c0_69, %c8_70] : memref<16x28xf32, #tpu.memory_space<vmem>>, vector<16x4xf32>
    tpu.vector_store %arg4[%c0_69, %c8_70], %185 {strides = array<i32>} : memref<16x28xf32, #tpu.memory_space<vmem>>, vector<16x4xf32>,
    %187 = vector.extract_strided_slice %176 {offsets = [0, 4], sizes = [16, 4], strides = [1, 1]} : vector<16x8xf32> to vector<16x4xf32>
    %188 = math.exp %187 : vector<16x4xf32>
    %c0_71 = arith.constant 0 : index
    %c12 = arith.constant 12 : index
    %189 = vector.load %arg4[%c0_71, %c12] : memref<16x28xf32, #tpu.memory_space<vmem>>, vector<16x4xf32>
    tpu.vector_store %arg4[%c0_71, %c12], %188 {strides = array<i32>} : memref<16x28xf32, #tpu.memory_space<vmem>>, vector<16x4xf32>,
    %190 = vector.extract_strided_slice %179 {offsets = [0, 0], sizes = [16, 4], strides = [1, 1]} : vector<16x8xf32> to vector<16x4xf32>
    %c0_72 = arith.constant 0 : index
    %c16 = arith.constant 16 : index
    %191 = vector.load %arg4[%c0_72, %c16] : memref<16x28xf32, #tpu.memory_space<vmem>>, vector<16x4xf32>
    tpu.vector_store %arg4[%c0_72, %c16], %190 {strides = array<i32>} : memref<16x28xf32, #tpu.memory_space<vmem>>, vector<16x4xf32>,
    %192 = vector.extract_strided_slice %179 {offsets = [0, 4], sizes = [16, 4], strides = [1, 1]} : vector<16x8xf32> to vector<16x4xf32>
    %193 = math.exp %192 : vector<16x4xf32>
    %c0_73 = arith.constant 0 : index
    %c20 = arith.constant 20 : index
    %194 = vector.load %arg4[%c0_73, %c20] : memref<16x28xf32, #tpu.memory_space<vmem>>, vector<16x4xf32>
    tpu.vector_store %arg4[%c0_73, %c20], %193 {strides = array<i32>} : memref<16x28xf32, #tpu.memory_space<vmem>>, vector<16x4xf32>,
    %195 = vector.extract_strided_slice %161 {offsets = [0, 8], sizes = [16, 4], strides = [1, 1]} : vector<16x12xf32> to vector<16x4xf32>
    %cst_74 = arith.constant dense<0xFF800000> : vector<16xf32>
    %196 = vector.multi_reduction <maximumf>, %195, %cst_74 [1] : vector<16x4xf32> to vector<16xf32>
    %197 = vector.shape_cast %196 : vector<16xf32> to vector<16x1xf32>
    %198 = vector.broadcast %197 : vector<16x1xf32> to vector<16x4xf32>
    %199 = arith.subf %195, %198 : vector<16x4xf32>
    %200 = math.exp %199 : vector<16x4xf32>
    %cst_75 = arith.constant dense<0.000000e+00> : vector<16xf32>
    %201 = vector.multi_reduction <add>, %200, %cst_75 [1] : vector<16x4xf32> to vector<16xf32>
    %202 = vector.shape_cast %201 : vector<16xf32> to vector<16x1xf32>
    %203 = tpu.reciprocal %202 {approx = true} : vector<16x1xf32> -> vector<16x1xf32>
    %204 = vector.broadcast %203 : vector<16x1xf32> to vector<16x4xf32>
    %205 = arith.mulf %200, %204 : vector<16x4xf32>
    %c0_76 = arith.constant 0 : index
    %c24_77 = arith.constant 24 : index
    %206 = vector.load %arg4[%c0_76, %c24_77] : memref<16x28xf32, #tpu.memory_space<vmem>>, vector<16x4xf32>
    tpu.vector_store %arg4[%c0_76, %c24_77], %205 {strides = array<i32>} : memref<16x28xf32, #tpu.memory_space<vmem>>, vector<16x4xf32>,
    return
  }
  func.func @transform_0(%arg0: i32) -> (i32, i32) {
    %c0_i32 = arith.constant 0 : i32
    %c0_i32_0 = arith.constant 0 : i32
    return %arg0, %c0_i32 : i32, i32
  }
  func.func @transform_1(%arg0: i32) -> (i32, i32, i32) {
    %c0_i32 = arith.constant 0 : i32
    %c0_i32_0 = arith.constant 0 : i32
    %c0_i32_1 = arith.constant 0 : i32
    return %c0_i32, %arg0, %c0_i32_0 : i32, i32, i32
  }
  func.func @transform_2(%arg0: i32) -> (i32, i32) {
    %c0_i32 = arith.constant 0 : i32
    %c0_i32_0 = arith.constant 0 : i32
    %c0_i32_1 = arith.constant 0 : i32
    return %c0_i32, %c0_i32_0 : i32, i32
  }
  func.func @transform_3(%arg0: i32) -> (i32, i32) {
    %c0_i32 = arith.constant 0 : i32
    %c0_i32_0 = arith.constant 0 : i32
    return %arg0, %c0_i32 : i32, i32
  }
}

</mosaic_0001>

<llo_original>
// kernel: position_predictor_forward.1
$region0: #{position_predictor_forward.1}
  #allocation0 [shape = 'u32[]', space=smem, size = 0x4, offset = 0x4, fixed_abs, tag = 'smem constant byte address 0x4 - core index']
  #allocation1 [shape = 'u32[72,128]{1,0:T(1,128)}', space=vmem, size = 0x9000, scoped, tag = 'internal scratch']
  %s0 = inlined_call_operand.vmem [shape: bf16[16,16], index: 0, kind: input, shape index: {}]
  %s1 = inlined_call_operand.vmem [shape: bf16[3,16,8], index: 1, kind: input, shape index: {}]
  %s2 = inlined_call_operand.hbm [shape: f32[400,128], index: 2, kind: input, shape index: {}]
  %s3 = inlined_call_operand.vmem [shape: f32[16,28], index: 3, kind: output, shape index: {}]
  %s4 = sld [smem:[#allocation0]]
  $region26: #{position_predictor_forward.1} parent=0
    _
  %s6 = ssub.s32 1, %s4
  %s7 = scalar_select 0, %s6, %s4
  $region1: #{position_predictor_forward.1} parent=0
    #allocation2 [shape = 'u8[204800]{0}', space=vmem, size = 0x32000, scoped, tag = 'input window, operand 2, single buffered']
    #allocation3 [shape = 's32[1]{0}', space=sflag, size = 0x4, scoped, tag = 'scoped memory for position_predictor_forward.1']
    %8 = vsyncpa [#allocation3], 0
    // Predicated region
    $region2: #{position_predictor_forward.1} parent=1 // pred_check
      _
    $region3: #{position_predictor_forward.1} parent=1 // pred_check_branch
      %10 = sbr.rel (0) target = $region5
    $region4: #{position_predictor_forward.1} parent=1 // pred_region
      _
    $region5: #{position_predictor_forward.1} parent=1 // pred_fallthru
      _
    // Predicated region
    $region6: #{position_predictor_forward.1} parent=1 // pred_check
      _
    $region7: #{position_predictor_forward.1} parent=1 // pred_check_branch
      %12 = sbr.rel (0) target = $region9
    $region8: #{position_predictor_forward.1} parent=1 // pred_region
      _
    $region9: #{position_predictor_forward.1} parent=1 // pred_fallthru
      _
    // Predicated region
    $region10: #{position_predictor_forward.1} parent=1 // pred_check
      _
    $region11: #{position_predictor_forward.1} parent=1 // pred_check_branch
      %14 = sbr.rel (0) target = $region13
    $region12: #{position_predictor_forward.1} parent=1 // pred_region
      %16 = vsyncadd [#allocation3], 0
      %s17 = sshll.u32 %s2, 4
      %s18 = int_to_ptr.hbm [resolvable:$true] %s17
      %s19 = sshll.u32 [#allocation2], 4
      %s20 = int_to_ptr.vmem [resolvable:$true] %s19
      %25 = dma.hbm_to_vmem [thread:$0]  %s18, 6400, %s20, [#allocation3], 128, 128, 8
    $region13: #{position_predictor_forward.1} parent=1 // pred_fallthru
      _
    // Predicated region
    $region14: #{position_predictor_forward.1} parent=1 // pred_check
      _
    $region15: #{position_predictor_forward.1} parent=1 // pred_check_branch
      %27 = sbr.rel (0) target = $region17
    $region16: #{position_predictor_forward.1} parent=1 // pred_region
      %29 = dma.done [#allocation3], 6400
    $region17: #{position_predictor_forward.1} parent=1 // pred_fallthru
      _
    %v31 = vld [vmem:[%s0] sm:$0xf]
    %v32 = vld [vmem:[%s0 + $0x4] sm:$0xf]
    %v33 = vld [vmem:[%s1] sm:$0xf]
    %v34 = vld [vmem:[%s1 + $0x4] sm:$0xf]
    %s35 = scalar_lea.vmem %s1, 8
    %v36 = vld [vmem:[%s35] sm:$0xf]
    %v37 = vld [vmem:[%s35 + $0x4] sm:$0xf]
    %s38 = scalar_lea.vmem %s1, 16
    %v39 = vld [vmem:[%s38] sm:$0xf]
    %v40 = vld [vmem:[%s38 + $0x4] sm:$0xf]
    %v41 = vld [vmem:[#allocation2] sm:$0xff]
    %v42 = vpack.c.bf16 %v41, %v41
    %v43 = vld [vmem:[#allocation2 + $0x8] sm:$0xff]
    %v44 = vld [vmem:[#allocation2 + $0x10] sm:$0xff]
    %v45 = vpack.c.bf16 %v44, %v43
    %v46 = vld [vmem:[#allocation2 + $0x18] sm:$0xff]
    %v47 = vld [vmem:[#allocation2 + $0x20] sm:$0xff]
    %v48 = vpack.c.bf16 %v47, %v46
    %v49 = vld [vmem:[#allocation2 + $0x28] sm:$0xff]
    %v50 = vld [vmem:[#allocation2 + $0x30] sm:$0xff]
    %v51 = vpack.c.bf16 %v50, %v49
    %v52 = vld [vmem:[#allocation2 + $0x38] sm:$0xff]
    %v53 = vld [vmem:[#allocation2 + $0x40] sm:$0xff]
    %v54 = vld [vmem:[#allocation2 + $0x48] sm:$0xff]
    %v55 = vld [vmem:[#allocation2 + $0x50] sm:$0xff]
    %v56 = vpack.c.bf16 %v53, %v52
    %v57 = vpack.c.bf16 %v55, %v54
    %v58 = vld [vmem:[#allocation2 + $0x58] sm:$0x1]
    %v61 = vunpack.c.l.b16 %v33
    %v62 = vunpack.c.l.b16 %v34
    %v63 = vpack.c.b16 %v62, %v61
    %vm64 = vcmask 64512
    %v66 = vsel %vm64, %v63, 0
    %vm68 = vcmask 1043456
    %v70 = vsel %vm68, %v42, 0
    %72 = vmatpush.bf16.msra.mxu0 0
    %73 = vmatpush.bf16.msra.mxu0 0
    %74 = vmatpush.bf16.msra.mxu0 0
    %75 = vmatpush.bf16.msra.mxu0 0
    %76 = vmatpush.bf16.msra.mxu0 0
    %77 = vmatpush.bf16.msra.mxu0 0
    %78 = vmatpush.bf16.msra.mxu0 0
    %79 = vmatpush.bf16.msra.mxu0 %v70
    %80 = vmatmul.bf16.gmra.mxu0 %v66
    %v81 = vpop.f32.mrf.mxu0
    %v82 = vadd.f32 0.0, %v81
    %v83 = vpop.f32.mrf.mxu0
    %v84 = vadd.f32 0.0, %v83
    %85 = vdwg.mxu0
    %v88 = vunpack.c.l.b16 %v36
    %v89 = vunpack.c.l.b16 %v37
    %v90 = vpack.c.b16 %v89, %v88
    %v92 = vsel %vm64, %v90, 0
    %94 = vmatpush.bf16.msra.mxu0 0
    %95 = vmatpush.bf16.msra.mxu0 0
    %96 = vmatpush.bf16.msra.mxu0 0
    %97 = vmatpush.bf16.msra.mxu0 0
    %98 = vmatpush.bf16.msra.mxu0 0
    %99 = vmatpush.bf16.msra.mxu0 0
    %100 = vmatpush.bf16.msra.mxu0 0
    %101 = vmatpush.bf16.msra.mxu0 %v70
    %102 = vmatmul.bf16.gmra.mxu0 %v92
    %v103 = vpop.f32.mrf.mxu0
    %v104 = vadd.f32 0.0, %v103
    %v105 = vpop.f32.mrf.mxu0
    %v106 = vadd.f32 0.0, %v105
    %107 = vdwg.mxu0
    %v110 = vunpack.c.l.b16 %v39
    %v111 = vunpack.c.l.b16 %v40
    %v112 = vpack.c.b16 %v111, %v110
    %v114 = vsel %vm64, %v112, 0
    %116 = vmatpush.bf16.msra.mxu0 0
    %117 = vmatpush.bf16.msra.mxu0 0
    %118 = vmatpush.bf16.msra.mxu0 0
    %119 = vmatpush.bf16.msra.mxu0 0
    %120 = vmatpush.bf16.msra.mxu0 0
    %121 = vmatpush.bf16.msra.mxu0 0
    %122 = vmatpush.bf16.msra.mxu0 0
    %123 = vmatpush.bf16.msra.mxu0 %v70
    %124 = vmatmul.bf16.gmra.mxu0 %v114
    %v125 = vpop.f32.mrf.mxu0
    %v126 = vadd.f32 0.0, %v125
    %v127 = vpop.f32.mrf.mxu0
    %v128 = vadd.f32 0.0, %v127
    %129 = vdwg.mxu0
    %v130 = vmul.f32 %v82, %v82
    %v131 = vmul.f32 %v84, %v84
    %v132 = vmul.f32 %v104, %v104
    %v133 = vmul.f32 %v106, %v106
    %v134 = vadd.f32 %v130, %v132
    %v135 = vadd.f32 %v131, %v133
    %v136 = vmul.f32 %v126, %v126
    %v137 = vmul.f32 %v128, %v128
    %v138 = vadd.f32 %v134, %v136
    %v139 = vadd.f32 %v135, %v137
    %v140 = vrsqrt.pop %v138
    %v141 = vmul.f32 %v140, %v138
    %v142 = vmul.f32 %v141, %v140
    %v143 = vmul.f32 0.5, %v142
    %v144 = vsub.f32 1.5, %v143
    %v145 = vmul.f32 %v140, %v144
    %v146 = vmul.f32 %v138, %v145
    %vm147 = vcmp.eq.f32.partialorder %v138, inf
    %v148 = vsel %vm147, %v138, %v146
    %vm149 = vcmp.eq.f32.partialorder %v138, 0.0
    %v150 = vand.u32 %v138, 2147483648
    %v151 = vsel %vm149, %v150, %v148
    %v152 = vrsqrt.pop %v139
    %v153 = vmul.f32 %v152, %v139
    %v154 = vmul.f32 %v153, %v152
    %v155 = vmul.f32 0.5, %v154
    %v156 = vsub.f32 1.5, %v155
    %v157 = vmul.f32 %v152, %v156
    %v158 = vmul.f32 %v139, %v157
    %vm159 = vcmp.eq.f32.partialorder %v139, inf
    %v160 = vsel %vm159, %v139, %v158
    %vm161 = vcmp.eq.f32.partialorder %v139, 0.0
    %v162 = vand.u32 %v139, 2147483648
    %v163 = vsel %vm161, %v162, %v160
    %v164 = vpack.c.bf16 %v163, %v151
    %v167 = vunpack.c.l.b16 %v31
    %v168 = vunpack.c.l.b16 %v32
    %v169 = vpack.c.b16 %v168, %v167
    %vm170 = vcmask 130048
    %v172 = vsel %vm170, %v169, 0
    %174 = vmatpush.bf16.msra.mxu0 0
    %175 = vmatpush.bf16.msra.mxu0 0
    %176 = vmatpush.bf16.msra.mxu0 0
    %177 = vmatpush.bf16.msra.mxu0 0
    %178 = vmatpush.bf16.msra.mxu0 0
    %179 = vmatpush.bf16.msra.mxu0 0
    %180 = vmatpush.bf16.msra.mxu0 0
    %181 = vmatpush.bf16.msra.mxu0 %v51
    %182 = vmatmul.bf16.gmra.mxu0 %v172
    %v183 = vpop.f32.mrf.mxu0
    %v184 = vadd.f32 0.0, %v183
    %v185 = vpop.f32.mrf.mxu0
    %v186 = vadd.f32 0.0, %v185
    %187 = vdwg.mxu0
    %v189 = vsel %vm170, %v164, 0
    %191 = vmatpush.bf16.msra.mxu0 0
    %192 = vmatpush.bf16.msra.mxu0 0
    %193 = vmatpush.bf16.msra.mxu0 0
    %194 = vmatpush.bf16.msra.mxu0 0
    %195 = vmatpush.bf16.msra.mxu0 0
    %196 = vmatpush.bf16.msra.mxu0 0
    %197 = vmatpush.bf16.msra.mxu0 0
    %198 = vmatpush.bf16.msra.mxu0 %v48
    %199 = vmatmul.bf16.gmra.mxu0 %v189
    %v200 = vpop.f32.mrf.mxu0
    %v201 = vadd.f32 %v184, %v200
    %v202 = vpop.f32.mrf.mxu0
    %v203 = vadd.f32 %v186, %v202
    %204 = vdwg.mxu0
    %v205 = vpack.c.bf16 %v203, %v201
    %v206 = vperm.slane %v58, 0
    %vm207 = vcmask 261120
    %v209 = vsel %vm207, %v205, 0
    %211 = vmatpush.bf16.msra.mxu0 0
    %212 = vmatpush.bf16.msra.mxu0 0
    %213 = vmatpush.bf16.msra.mxu0 0
    %214 = vmatpush.bf16.msra.mxu0 0
    %215 = vmatpush.bf16.msra.mxu0 0
    %216 = vmatpush.bf16.msra.mxu0 0
    %217 = vmatpush.bf16.msra.mxu0 %v57
    %218 = vmatpush.bf16.msra.mxu0 %v56
    %219 = vmatmul.bf16.gmra.mxu0 %v209
    %v220 = vpop.f32.mrf.mxu0
    %v221 = vadd.f32 %v206, %v220
    %v222 = vpop.f32.mrf.mxu0
    %v223 = vadd.f32 %v206, %v222
    %224 = vdwg.mxu0
    %v225 = vxor.u32 %v221, 2147483648
    %v226 = vxor.u32 %v223, 2147483648
    %v227 = vmul.f32 %v225, 1.442695
    %v228 = vpow.pop %v227
    %v229 = vmul.f32 %v226, 1.442695
    %v230 = vpow.pop %v229
    %v231 = vadd.f32 %v228, 1.0
    %v232 = vadd.f32 %v230, 1.0
    %v233 = vrcp.pop %v231
    %v234 = vmul.f32 %v231, %v233
    %v235 = vsub.f32 1.0, %v234
    %v236 = vmul.f32 %v233, %v235
    %v237 = vadd.f32 %v233, %v236
    %vm238 = vweird.f32 %v231
    %vm239 = vweird.f32 %v233
    %vm240 = vmor %vm238, %vm239
    %v241 = vsel %vm240, %v233, %v237
    %v242 = vand.u32 2147483647, %v231
    %vm243 = vcmp.eq.f32.partialorder %v242, 8.507059e+37
    %v244 = vand.u32 %v231, 2147483648
    %v245 = vor.u32 1.1754944e-38, %v244
    %v246 = vsel %vm243, %v245, %v241
    %v247 = vmul.f32 1.0, %v246
    %v248 = vrcp.pop %v232
    %v249 = vmul.f32 %v232, %v248
    %v250 = vsub.f32 1.0, %v249
    %v251 = vmul.f32 %v248, %v250
    %v252 = vadd.f32 %v248, %v251
    %vm253 = vweird.f32 %v232
    %vm254 = vweird.f32 %v248
    %vm255 = vmor %vm253, %vm254
    %v256 = vsel %vm255, %v248, %v252
    %v257 = vand.u32 2147483647, %v232
    %vm258 = vcmp.eq.f32.partialorder %v257, 8.507059e+37
    %v259 = vand.u32 %v232, 2147483648
    %v260 = vor.u32 1.1754944e-38, %v259
    %v261 = vsel %vm258, %v260, %v256
    %v262 = vmul.f32 1.0, %v261
    %v263 = vpack.c.bf16 %v84, %v82
    %v265 = vsel %vm170, %v263, 0
    %267 = vmatpush.bf16.msra.mxu0 0
    %268 = vmatpush.bf16.msra.mxu0 0
    %269 = vmatpush.bf16.msra.mxu0 0
    %270 = vmatpush.bf16.msra.mxu0 0
    %271 = vmatpush.bf16.msra.mxu0 0
    %272 = vmatpush.bf16.msra.mxu0 0
    %273 = vmatpush.bf16.msra.mxu0 0
    %274 = vmatpush.bf16.msra.mxu0 %v45
    %275 = vmatmul.bf16.gmra.mxu0 %v265
    %v276 = vpop.f32.mrf.mxu0
    %v277 = vadd.f32 0.0, %v276
    %v278 = vpop.f32.mrf.mxu0
    %v279 = vadd.f32 0.0, %v278
    %280 = vdwg.mxu0
    %v281 = vmul.f32 %v247, %v277
    %v282 = vmul.f32 %v262, %v279
    %v283 = vpack.c.bf16 %v106, %v104
    %v285 = vsel %vm170, %v283, 0
    %287 = vmatpush.bf16.msra.mxu0 0
    %288 = vmatpush.bf16.msra.mxu0 0
    %289 = vmatpush.bf16.msra.mxu0 0
    %290 = vmatpush.bf16.msra.mxu0 0
    %291 = vmatpush.bf16.msra.mxu0 0
    %292 = vmatpush.bf16.msra.mxu0 0
    %293 = vmatpush.bf16.msra.mxu0 0
    %294 = vmatpush.bf16.msra.mxu0 %v45
    %295 = vmatmul.bf16.gmra.mxu0 %v285
    %v296 = vpop.f32.mrf.mxu0
    %v297 = vadd.f32 0.0, %v296
    %v298 = vpop.f32.mrf.mxu0
    %v299 = vadd.f32 0.0, %v298
    %300 = vdwg.mxu0
    %v301 = vmul.f32 %v247, %v297
    %v302 = vmul.f32 %v262, %v299
    %v303 = vpack.c.bf16 %v128, %v126
    %v305 = vsel %vm170, %v303, 0
    %307 = vmatpush.bf16.msra.mxu0 0
    %308 = vmatpush.bf16.msra.mxu0 0
    %309 = vmatpush.bf16.msra.mxu0 0
    %310 = vmatpush.bf16.msra.mxu0 0
    %311 = vmatpush.bf16.msra.mxu0 0
    %312 = vmatpush.bf16.msra.mxu0 0
    %313 = vmatpush.bf16.msra.mxu0 0
    %314 = vmatpush.bf16.msra.mxu0 %v45
    %315 = vmatmul.bf16.gmra.mxu0 %v305
    %v316 = vpop.f32.mrf.mxu0
    %v317 = vadd.f32 0.0, %v316
    %v318 = vpop.f32.mrf.mxu0
    %v319 = vadd.f32 0.0, %v318
    %320 = vdwg.mxu0
    %v321 = vmul.f32 %v247, %v317
    %v322 = vmul.f32 %v262, %v319
    %v323 = vld [vmem:[#allocation2 + $0x60] sm:$0xff]
    %v324 = vld [vmem:[#allocation2 + $0x68] sm:$0xff]
    %v325 = vpack.c.bf16 %v324, %v323
    %v326 = vpack.c.bf16 %v282, %v281
    %v328 = vsel %vm170, %v326, 0
    %330 = vmatpush.bf16.msra.mxu0 0
    %331 = vmatpush.bf16.msra.mxu0 0
    %332 = vmatpush.bf16.msra.mxu0 0
    %333 = vmatpush.bf16.msra.mxu0 0
    %334 = vmatpush.bf16.msra.mxu0 0
    %335 = vmatpush.bf16.msra.mxu0 0
    %336 = vmatpush.bf16.msra.mxu0 0
    %337 = vmatpush.bf16.msra.mxu0 %v325
    %338 = vmatmul.bf16.gmra.mxu0 %v328
    %v339 = vpop.f32.mrf.mxu0
    %v340 = vadd.f32 0.0, %v339
    %v341 = vpop.f32.mrf.mxu0
    %v342 = vadd.f32 0.0, %v341
    %343 = vdwg.mxu0
    %v344 = vpack.c.bf16 %v302, %v301
    %v346 = vsel %vm170, %v344, 0
    %348 = vmatpush.bf16.msra.mxu0 0
    %349 = vmatpush.bf16.msra.mxu0 0
    %350 = vmatpush.bf16.msra.mxu0 0
    %351 = vmatpush.bf16.msra.mxu0 0
    %352 = vmatpush.bf16.msra.mxu0 0
    %353 = vmatpush.bf16.msra.mxu0 0
    %354 = vmatpush.bf16.msra.mxu0 0
    %355 = vmatpush.bf16.msra.mxu0 %v325
    %356 = vmatmul.bf16.gmra.mxu0 %v346
    %v357 = vpop.f32.mrf.mxu0
    %v358 = vadd.f32 0.0, %v357
    %v359 = vpop.f32.mrf.mxu0
    %v360 = vadd.f32 0.0, %v359
    %361 = vdwg.mxu0
    %v362 = vpack.c.bf16 %v322, %v321
    %v364 = vsel %vm170, %v362, 0
    %366 = vmatpush.bf16.msra.mxu0 0
    %367 = vmatpush.bf16.msra.mxu0 0
    %368 = vmatpush.bf16.msra.mxu0 0
    %369 = vmatpush.bf16.msra.mxu0 0
    %370 = vmatpush.bf16.msra.mxu0 0
    %371 = vmatpush.bf16.msra.mxu0 0
    %372 = vmatpush.bf16.msra.mxu0 0
    %373 = vmatpush.bf16.msra.mxu0 %v325
    %374 = vmatmul.bf16.gmra.mxu0 %v364
    %v375 = vpop.f32.mrf.mxu0
    %v376 = vadd.f32 0.0, %v375
    %v377 = vpop.f32.mrf.mxu0
    %v378 = vadd.f32 0.0, %v377
    %379 = vdwg.mxu0
    %v380 = vmul.f32 %v281, %v340
    %v381 = vmul.f32 %v282, %v342
    %v382 = vmul.f32 %v301, %v358
    %v383 = vmul.f32 %v302, %v360
    %v384 = vadd.f32 %v380, %v382
    %v385 = vadd.f32 %v381, %v383
    %v386 = vmul.f32 %v321, %v376
    %v387 = vmul.f32 %v322, %v378
    %v388 = vadd.f32 %v384, %v386
    %v389 = vadd.f32 %v385, %v387
    %v390 = vmul.f32 %v340, %v340
    %v391 = vmul.f32 %v342, %v342
    %v392 = vmul.f32 %v358, %v358
    %v393 = vmul.f32 %v360, %v360
    %v394 = vadd.f32 %v390, %v392
    %v395 = vadd.f32 %v391, %v393
    %v396 = vmul.f32 %v376, %v376
    %v397 = vmul.f32 %v378, %v378
    %v398 = vadd.f32 %v394, %v396
    %v399 = vadd.f32 %v395, %v397
    %vm400 = vcmp.ge.f32.partialorder %v388, 0.0
    %vm401 = vcmp.ge.f32.partialorder %v389, 0.0
    %v402 = vmul.f32 %v388, 0.99
    %v403 = vmul.f32 %v389, 0.99
    %v404 = vadd.f32 %v398, 1e-06
    %v405 = vadd.f32 %v399, 1e-06
    %v406 = vrcp.pop %v404
    %v407 = vrcp.pop %v405
    %v408 = vmul.f32 %v402, %v406
    %v409 = vmul.f32 %v403, %v407
    %v410 = vsel %vm400, 0.0, %v408
    %v411 = vsel %vm401, 0.0, %v409
    %v412 = vmul.f32 %v410, %v340
    %v413 = vmul.f32 %v411, %v342
    %v414 = vsub.f32 %v281, %v412
    %v415 = vsub.f32 %v282, %v413
    %v416 = vmul.f32 %v410, %v358
    %v417 = vmul.f32 %v411, %v360
    %v418 = vsub.f32 %v301, %v416
    %v419 = vsub.f32 %v302, %v417
    %v420 = vmul.f32 %v410, %v376
    %v421 = vmul.f32 %v411, %v378
    %v422 = vsub.f32 %v321, %v420
    %v423 = vsub.f32 %v322, %v421
    %vm424 = vcmp.ge.f32.partialorder %v201, 0.0
    %vm425 = vcmp.ge.f32.partialorder %v203, 0.0
    %v426 = vmul.f32 %v201, 0.01
    %v427 = vmul.f32 %v203, 0.01
    %v428 = vsel %vm424, %v201, %v426
    %v429 = vsel %vm425, %v203, %v427
    %v430 = vld [vmem:[#allocation2 + $0x70] sm:$0xff]
    %v431 = vld [vmem:[#allocation2 + $0x78] sm:$0xff]
    %v432 = vpack.c.bf16 %v431, %v430
    %v433 = vld [vmem:[#allocation2 + $0x80] sm:$0xff]
    %v434 = vld [vmem:[#allocation2 + $0x88] sm:$0xff]
    %v435 = vpack.c.bf16 %v434, %v433
    %v436 = vld [vmem:[#allocation2 + $0x90] sm:$0xff]
    %v437 = vld [vmem:[#allocation2 + $0x98] sm:$0xff]
    %v438 = vpack.c.bf16 %v437, %v436
    %v439 = vld [vmem:[#allocation2 + $0xa0] sm:$0xff]
    %v440 = vld [vmem:[#allocation2 + $0xa8] sm:$0xff]
    %v441 = vld [vmem:[#allocation2 + $0xb0] sm:$0xff]
    %v442 = vld [vmem:[#allocation2 + $0xb8] sm:$0xff]
    %v443 = vpack.c.bf16 %v440, %v439
    %v444 = vpack.c.bf16 %v442, %v441
    %v445 = vld [vmem:[#allocation2 + $0xc0] sm:$0xff]
    %v446 = vld [vmem:[#allocation2 + $0xc8] sm:$0xff]
    %v447 = vld [vmem:[#allocation2 + $0xd0] sm:$0xff]
    %v448 = vld [vmem:[#allocation2 + $0xd8] sm:$0xff]
    %v449 = vpack.c.bf16 %v446, %v445
    %v450 = vpack.c.bf16 %v448, %v447
    %v451 = vld [vmem:[#allocation2 + $0xe0] sm:$0x1]
    %v452 = vpack.c.bf16 %v415, %v414
    %v454 = vsel %vm170, %v452, 0
    %456 = vmatpush.bf16.msra.mxu0 0
    %457 = vmatpush.bf16.msra.mxu0 0
    %458 = vmatpush.bf16.msra.mxu0 0
    %459 = vmatpush.bf16.msra.mxu0 0
    %460 = vmatpush.bf16.msra.mxu0 0
    %461 = vmatpush.bf16.msra.mxu0 0
    %462 = vmatpush.bf16.msra.mxu0 0
    %463 = vmatpush.bf16.msra.mxu0 %v432
    %464 = vmatmul.bf16.gmra.mxu0 %v454
    %v465 = vpop.f32.mrf.mxu0
    %v466 = vadd.f32 0.0, %v465
    %v467 = vpop.f32.mrf.mxu0
    %v468 = vadd.f32 0.0, %v467
    %469 = vdwg.mxu0
    %v470 = vpack.c.bf16 %v419, %v418
    %v472 = vsel %vm170, %v470, 0
    %474 = vmatpush.bf16.msra.mxu0 0
    %475 = vmatpush.bf16.msra.mxu0 0
    %476 = vmatpush.bf16.msra.mxu0 0
    %477 = vmatpush.bf16.msra.mxu0 0
    %478 = vmatpush.bf16.msra.mxu0 0
    %479 = vmatpush.bf16.msra.mxu0 0
    %480 = vmatpush.bf16.msra.mxu0 0
    %481 = vmatpush.bf16.msra.mxu0 %v432
    %482 = vmatmul.bf16.gmra.mxu0 %v472
    %v483 = vpop.f32.mrf.mxu0
    %v484 = vadd.f32 0.0, %v483
    %v485 = vpop.f32.mrf.mxu0
    %v486 = vadd.f32 0.0, %v485
    %487 = vdwg.mxu0
    %v488 = vpack.c.bf16 %v423, %v422
    %v490 = vsel %vm170, %v488, 0
    %492 = vmatpush.bf16.msra.mxu0 0
    %493 = vmatpush.bf16.msra.mxu0 0
    %494 = vmatpush.bf16.msra.mxu0 0
    %495 = vmatpush.bf16.msra.mxu0 0
    %496 = vmatpush.bf16.msra.mxu0 0
    %497 = vmatpush.bf16.msra.mxu0 0
    %498 = vmatpush.bf16.msra.mxu0 0
    %499 = vmatpush.bf16.msra.mxu0 %v432
    %500 = vmatmul.bf16.gmra.mxu0 %v490
    %v501 = vpop.f32.mrf.mxu0
    %v502 = vadd.f32 0.0, %v501
    %v503 = vpop.f32.mrf.mxu0
    %v504 = vadd.f32 0.0, %v503
    %505 = vdwg.mxu0
    %v506 = vmul.f32 %v466, %v466
    %v507 = vmul.f32 %v468, %v468
    %v508 = vmul.f32 %v484, %v484
    %v509 = vmul.f32 %v486, %v486
    %v510 = vadd.f32 %v506, %v508
    %v511 = vadd.f32 %v507, %v509
    %v512 = vmul.f32 %v502, %v502
    %v513 = vmul.f32 %v504, %v504
    %v514 = vadd.f32 %v510, %v512
    %v515 = vadd.f32 %v511, %v513
    %v516 = vrsqrt.pop %v514
    %v517 = vmul.f32 %v516, %v514
    %v518 = vmul.f32 %v517, %v516
    %v519 = vmul.f32 0.5, %v518
    %v520 = vsub.f32 1.5, %v519
    %v521 = vmul.f32 %v516, %v520
    %v522 = vmul.f32 %v514, %v521
    %vm523 = vcmp.eq.f32.partialorder %v514, inf
    %v524 = vsel %vm523, %v514, %v522
    %vm525 = vcmp.eq.f32.partialorder %v514, 0.0
    %v526 = vand.u32 %v514, 2147483648
    %v527 = vsel %vm525, %v526, %v524
    %v528 = vrsqrt.pop %v515
    %v529 = vmul.f32 %v528, %v515
    %v530 = vmul.f32 %v529, %v528
    %v531 = vmul.f32 0.5, %v530
    %v532 = vsub.f32 1.5, %v531
    %v533 = vmul.f32 %v528, %v532
    %v534 = vmul.f32 %v515, %v533
    %vm535 = vcmp.eq.f32.partialorder %v515, inf
    %v536 = vsel %vm535, %v515, %v534
    %vm537 = vcmp.eq.f32.partialorder %v515, 0.0
    %v538 = vand.u32 %v515, 2147483648
    %v539 = vsel %vm537, %v538, %v536
    %v540 = vpack.c.bf16 %v539, %v527
    %v541 = vpack.c.bf16 %v429, %v428
    %v543 = vsel %vm207, %v541, 0
    %545 = vmatpush.bf16.msra.mxu0 0
    %546 = vmatpush.bf16.msra.mxu0 0
    %547 = vmatpush.bf16.msra.mxu0 0
    %548 = vmatpush.bf16.msra.mxu0 0
    %549 = vmatpush.bf16.msra.mxu0 0
    %550 = vmatpush.bf16.msra.mxu0 0
    %551 = vmatpush.bf16.msra.mxu0 %v444
    %552 = vmatpush.bf16.msra.mxu0 %v443
    %553 = vmatmul.bf16.gmra.mxu0 %v543
    %v554 = vpop.f32.mrf.mxu0
    %v555 = vadd.f32 0.0, %v554
    %v556 = vpop.f32.mrf.mxu0
    %v557 = vadd.f32 0.0, %v556
    %558 = vdwg.mxu0
    %v560 = vsel %vm170, %v540, 0
    %562 = vmatpush.bf16.msra.mxu0 0
    %563 = vmatpush.bf16.msra.mxu0 0
    %564 = vmatpush.bf16.msra.mxu0 0
    %565 = vmatpush.bf16.msra.mxu0 0
    %566 = vmatpush.bf16.msra.mxu0 0
    %567 = vmatpush.bf16.msra.mxu0 0
    %568 = vmatpush.bf16.msra.mxu0 0
    %569 = vmatpush.bf16.msra.mxu0 %v438
    %570 = vmatmul.bf16.gmra.mxu0 %v560
    %v571 = vpop.f32.mrf.mxu0
    %v572 = vadd.f32 %v555, %v571
    %v573 = vpop.f32.mrf.mxu0
    %v574 = vadd.f32 %v557, %v573
    %575 = vdwg.mxu0
    %v576 = vpack.c.bf16 %v574, %v572
    %v577 = vperm.slane %v451, 0
    %v579 = vsel %vm207, %v576, 0
    %581 = vmatpush.bf16.msra.mxu0 0
    %582 = vmatpush.bf16.msra.mxu0 0
    %583 = vmatpush.bf16.msra.mxu0 0
    %584 = vmatpush.bf16.msra.mxu0 0
    %585 = vmatpush.bf16.msra.mxu0 0
    %586 = vmatpush.bf16.msra.mxu0 0
    %587 = vmatpush.bf16.msra.mxu0 %v450
    %588 = vmatpush.bf16.msra.mxu0 %v449
    %589 = vmatmul.bf16.gmra.mxu0 %v579
    %v590 = vpop.f32.mrf.mxu0
    %v591 = vadd.f32 %v577, %v590
    %v592 = vpop.f32.mrf.mxu0
    %v593 = vadd.f32 %v577, %v592
    %594 = vdwg.mxu0
    %v595 = vxor.u32 %v591, 2147483648
    %v596 = vxor.u32 %v593, 2147483648
    %v597 = vmul.f32 %v595, 1.442695
    %v598 = vpow.pop %v597
    %v599 = vmul.f32 %v596, 1.442695
    %v600 = vpow.pop %v599
    %v601 = vadd.f32 %v598, 1.0
    %v602 = vadd.f32 %v600, 1.0
    %v603 = vrcp.pop %v601
    %v604 = vmul.f32 %v601, %v603
    %v605 = vsub.f32 1.0, %v604
    %v606 = vmul.f32 %v603, %v605
    %v607 = vadd.f32 %v603, %v606
    %vm608 = vweird.f32 %v601
    %vm609 = vweird.f32 %v603
    %vm610 = vmor %vm608, %vm609
    %v611 = vsel %vm610, %v603, %v607
    %v612 = vand.u32 2147483647, %v601
    %vm613 = vcmp.eq.f32.partialorder %v612, 8.507059e+37
    %v614 = vand.u32 %v601, 2147483648
    %v615 = vor.u32 1.1754944e-38, %v614
    %v616 = vsel %vm613, %v615, %v611
    %v617 = vmul.f32 1.0, %v616
    %v618 = vrcp.pop %v602
    %v619 = vmul.f32 %v602, %v618
    %v620 = vsub.f32 1.0, %v619
    %v621 = vmul.f32 %v618, %v620
    %v622 = vadd.f32 %v618, %v621
    %vm623 = vweird.f32 %v602
    %vm624 = vweird.f32 %v618
    %vm625 = vmor %vm623, %vm624
    %v626 = vsel %vm625, %v618, %v622
    %v627 = vand.u32 2147483647, %v602
    %vm628 = vcmp.eq.f32.partialorder %v627, 8.507059e+37
    %v629 = vand.u32 %v602, 2147483648
    %v630 = vor.u32 1.1754944e-38, %v629
    %v631 = vsel %vm628, %v630, %v626
    %v632 = vmul.f32 1.0, %v631
    %v633 = vpack.c.bf16 %v468, %v466
    %v635 = vsel %vm170, %v633, 0
    %637 = vmatpush.bf16.msra.mxu0 0
    %638 = vmatpush.bf16.msra.mxu0 0
    %639 = vmatpush.bf16.msra.mxu0 0
    %640 = vmatpush.bf16.msra.mxu0 0
    %641 = vmatpush.bf16.msra.mxu0 0
    %642 = vmatpush.bf16.msra.mxu0 0
    %643 = vmatpush.bf16.msra.mxu0 0
    %644 = vmatpush.bf16.msra.mxu0 %v435
    %645 = vmatmul.bf16.gmra.mxu0 %v635
    %v646 = vpop.f32.mrf.mxu0
    %v647 = vadd.f32 0.0, %v646
    %v648 = vpop.f32.mrf.mxu0
    %v649 = vadd.f32 0.0, %v648
    %650 = vdwg.mxu0
    %v651 = vmul.f32 %v617, %v647
    %v652 = vmul.f32 %v632, %v649
    %v653 = vpack.c.bf16 %v486, %v484
    %v655 = vsel %vm170, %v653, 0
    %657 = vmatpush.bf16.msra.mxu0 0
    %658 = vmatpush.bf16.msra.mxu0 0
    %659 = vmatpush.bf16.msra.mxu0 0
    %660 = vmatpush.bf16.msra.mxu0 0
    %661 = vmatpush.bf16.msra.mxu0 0
    %662 = vmatpush.bf16.msra.mxu0 0
    %663 = vmatpush.bf16.msra.mxu0 0
    %664 = vmatpush.bf16.msra.mxu0 %v435
    %665 = vmatmul.bf16.gmra.mxu0 %v655
    %v666 = vpop.f32.mrf.mxu0
    %v667 = vadd.f32 0.0, %v666
    %v668 = vpop.f32.mrf.mxu0
    %v669 = vadd.f32 0.0, %v668
    %670 = vdwg.mxu0
    %v671 = vmul.f32 %v617, %v667
    %v672 = vmul.f32 %v632, %v669
    %v673 = vpack.c.bf16 %v504, %v502
    %v675 = vsel %vm170, %v673, 0
    %677 = vmatpush.bf16.msra.mxu0 0
    %678 = vmatpush.bf16.msra.mxu0 0
    %679 = vmatpush.bf16.msra.mxu0 0
    %680 = vmatpush.bf16.msra.mxu0 0
    %681 = vmatpush.bf16.msra.mxu0 0
    %682 = vmatpush.bf16.msra.mxu0 0
    %683 = vmatpush.bf16.msra.mxu0 0
    %684 = vmatpush.bf16.msra.mxu0 %v435
    %685 = vmatmul.bf16.gmra.mxu0 %v675
    %v686 = vpop.f32.mrf.mxu0
    %v687 = vadd.f32 0.0, %v686
    %v688 = vpop.f32.mrf.mxu0
    %v689 = vadd.f32 0.0, %v688
    %690 = vdwg.mxu0
    %v691 = vmul.f32 %v617, %v687
    %v692 = vmul.f32 %v632, %v689
    %v693 = vld [vmem:[#allocation2 + $0xe8] sm:$0xff]
    %v694 = vld [vmem:[#allocation2 + $0xf0] sm:$0xff]
    %v695 = vpack.c.bf16 %v694, %v693
    %v696 = vld [vmem:[#allocation2 + $0x148] sm:$0xff]
    %v697 = vld [vmem:[#allocation2 + $0x150] sm:$0xff]
    %v698 = vld [vmem:[#allocation2 + $0x158] sm:$0xff]
    %v699 = vld [vmem:[#allocation2 + $0x160] sm:$0xff]
    %v700 = vld [vmem:[#allocation2 + $0x168] sm:$0xff]
    %v701 = vld [vmem:[#allocation2 + $0x170] sm:$0xff]
    %v702 = vpack.c.bf16 %v697, %v696
    %v703 = vpack.c.bf16 %v699, %v698
    %v704 = vpack.c.bf16 %v701, %v700
    %v705 = vld [vmem:[#allocation2 + $0xf8] sm:$0xff]
    %v706 = vld [vmem:[#allocation2 + $0x100] sm:$0xff]
    %v707 = vld [vmem:[#allocation2 + $0x108] sm:$0xff]
    %v708 = vld [vmem:[#allocation2 + $0x110] sm:$0xff]
    %v709 = vld [vmem:[#allocation2 + $0x118] sm:$0xff]
    %v710 = vld [vmem:[#allocation2 + $0x120] sm:$0xff]
    %v711 = vpack.c.bf16 %v706, %v705
    %v712 = vpack.c.bf16 %v708, %v707
    %v713 = vpack.c.bf16 %v710, %v709
    %v714 = vld [vmem:[#allocation2 + $0x128] sm:$0xff]
    %v715 = vld [vmem:[#allocation2 + $0x130] sm:$0xff]
    %v716 = vld [vmem:[#allocation2 + $0x138] sm:$0xff]
    %v717 = vld [vmem:[#allocation2 + $0x140] sm:$0xff]
    %v718 = vpack.c.bf16 %v715, %v714
    %v719 = vpack.c.bf16 %v717, %v716
    %v720 = vld [vmem:[#allocation2 + $0x178] sm:$0xff]
    %v721 = vld [vmem:[#allocation2 + $0x180] sm:$0xf]
    %v722 = vpack.c.bf16 %v721, %v720
    %v723 = vld [vmem:[#allocation2 + $0x188] sm:$0x1]
    %v724 = vpack.c.bf16 %v652, %v651
    %v726 = vsel %vm170, %v724, 0
    %728 = vmatpush.bf16.msra.mxu0 0
    %729 = vmatpush.bf16.msra.mxu0 0
    %730 = vmatpush.bf16.msra.mxu0 0
    %731 = vmatpush.bf16.msra.mxu0 0
    %732 = vmatpush.bf16.msra.mxu0 0
    %733 = vmatpush.bf16.msra.mxu0 0
    %734 = vmatpush.bf16.msra.mxu0 0
    %735 = vmatpush.bf16.msra.mxu0 %v695
    %736 = vmatmul.bf16.gmra.mxu0 %v726
    %v737 = vpop.f32.mrf.mxu0
    %v738 = vadd.f32 0.0, %v737
    %v739 = vpop.f32.mrf.mxu0
    %v740 = vadd.f32 0.0, %v739
    %741 = vdwg.mxu0
    %v742 = vpack.c.bf16 %v672, %v671
    %v744 = vsel %vm170, %v742, 0
    %746 = vmatpush.bf16.msra.mxu0 0
    %747 = vmatpush.bf16.msra.mxu0 0
    %748 = vmatpush.bf16.msra.mxu0 0
    %749 = vmatpush.bf16.msra.mxu0 0
    %750 = vmatpush.bf16.msra.mxu0 0
    %751 = vmatpush.bf16.msra.mxu0 0
    %752 = vmatpush.bf16.msra.mxu0 0
    %753 = vmatpush.bf16.msra.mxu0 %v695
    %754 = vmatmul.bf16.gmra.mxu0 %v744
    %v755 = vpop.f32.mrf.mxu0
    %v756 = vadd.f32 0.0, %v755
    %v757 = vpop.f32.mrf.mxu0
    %v758 = vadd.f32 0.0, %v757
    %759 = vdwg.mxu0
    %v760 = vpack.c.bf16 %v692, %v691
    %v762 = vsel %vm170, %v760, 0
    %764 = vmatpush.bf16.msra.mxu0 0
    %765 = vmatpush.bf16.msra.mxu0 0
    %766 = vmatpush.bf16.msra.mxu0 0
    %767 = vmatpush.bf16.msra.mxu0 0
    %768 = vmatpush.bf16.msra.mxu0 0
    %769 = vmatpush.bf16.msra.mxu0 0
    %770 = vmatpush.bf16.msra.mxu0 0
    %771 = vmatpush.bf16.msra.mxu0 %v695
    %772 = vmatmul.bf16.gmra.mxu0 %v762
    %v773 = vpop.f32.mrf.mxu0
    %v774 = vadd.f32 0.0, %v773
    %v775 = vpop.f32.mrf.mxu0
    %v776 = vadd.f32 0.0, %v775
    %777 = vdwg.mxu0
    %v778 = vmul.f32 %v738, %v738
    %v779 = vmul.f32 %v740, %v740
    %v780 = vmul.f32 %v756, %v756
    %v781 = vmul.f32 %v758, %v758
    %v782 = vadd.f32 %v778, %v780
    %v783 = vadd.f32 %v779, %v781
    %v784 = vmul.f32 %v774, %v774
    %v785 = vmul.f32 %v776, %v776
    %v786 = vadd.f32 %v782, %v784
    %v787 = vadd.f32 %v783, %v785
    %v788 = vrsqrt.pop %v786
    %v789 = vmul.f32 %v788, %v786
    %v790 = vmul.f32 %v789, %v788
    %v791 = vmul.f32 0.5, %v790
    %v792 = vsub.f32 1.5, %v791
    %v793 = vmul.f32 %v788, %v792
    %v794 = vmul.f32 %v786, %v793
    %vm795 = vcmp.eq.f32.partialorder %v786, inf
    %v796 = vsel %vm795, %v786, %v794
    %vm797 = vcmp.eq.f32.partialorder %v786, 0.0
    %v798 = vand.u32 %v786, 2147483648
    %v799 = vsel %vm797, %v798, %v796
    %v800 = vrsqrt.pop %v787
    %v801 = vmul.f32 %v800, %v787
    %v802 = vmul.f32 %v801, %v800
    %v803 = vmul.f32 0.5, %v802
    %v804 = vsub.f32 1.5, %v803
    %v805 = vmul.f32 %v800, %v804
    %v806 = vmul.f32 %v787, %v805
    %vm807 = vcmp.eq.f32.partialorder %v787, inf
    %v808 = vsel %vm807, %v787, %v806
    %vm809 = vcmp.eq.f32.partialorder %v787, 0.0
    %v810 = vand.u32 %v787, 2147483648
    %v811 = vsel %vm809, %v810, %v808
    %v812 = vpack.c.bf16 %v811, %v799
    %813 = vmatpush.bf16.msra.mxu0 0
    %814 = vmatpush.bf16.msra.mxu0 0
    %815 = vmatpush.bf16.msra.mxu0 0
    %816 = vmatpush.bf16.msra.mxu0 0
    %817 = vmatpush.bf16.msra.mxu0 0
    %818 = vmatpush.bf16.msra.mxu0 0
    %819 = vmatpush.bf16.msra.mxu0 %v719
    %820 = vmatpush.bf16.msra.mxu0 %v718
    %821 = vmatmul.bf16.gmra.mxu0 %v579
    %v822 = vpop.f32.mrf.mxu0
    %v823 = vadd.f32 0.0, %v822
    %v824 = vpop.f32.mrf.mxu0
    %v825 = vadd.f32 0.0, %v824
    %826 = vdwg.mxu0
    %vm827 = vcmask 392192
    %v829 = vsel %vm827, %v812, 0
    %831 = vmatpush.bf16.msra.mxu0 0
    %832 = vmatpush.bf16.msra.mxu0 0
    %833 = vmatpush.bf16.msra.mxu0 0
    %834 = vmatpush.bf16.msra.mxu0 0
    %835 = vmatpush.bf16.msra.mxu0 0
    %836 = vmatpush.bf16.msra.mxu0 %v713
    %837 = vmatpush.bf16.msra.mxu0 %v712
    %838 = vmatpush.bf16.msra.mxu0 %v711
    %839 = vmatmul.bf16.gmra.mxu0 %v829
    %v840 = vpop.f32.mrf.mxu0
    %v841 = vadd.f32 %v823, %v840
    %v842 = vpop.f32.mrf.mxu0
    %v843 = vadd.f32 %v825, %v842
    %844 = vdwg.mxu0
    %v845 = vpack.c.bf16 %v843, %v841
    %v846 = vperm.slane %v723, 0
    %vm847 = vcmask 97280
    %v849 = vsel %vm847, %v845, 0
    %vm851 = vcmask 1045504
    %v853 = vsel %vm851, %v722, 0
    %855 = vmatpush.bf16.msra.mxu0 0
    %856 = vmatpush.bf16.msra.mxu0 0
    %857 = vmatpush.bf16.msra.mxu0 0
    %858 = vmatpush.bf16.msra.mxu0 0
    %859 = vmatpush.bf16.msra.mxu0 0
    %860 = vmatpush.bf16.msra.mxu0 0
    %861 = vmatpush.bf16.msra.mxu0 0
    %862 = vmatpush.bf16.msra.mxu0 %v853
    %863 = vmatmul.bf16.gmra.mxu0 %v849
    %v864 = vpop.f32.mrf.mxu0
    %v865 = vadd.f32 %v846, %v864
    %v866 = vpop.f32.mrf.mxu0
    %v867 = vadd.f32 %v846, %v866
    %868 = vdwg.mxu0
    %v869 = vxor.u32 %v865, 2147483648
    %v870 = vxor.u32 %v867, 2147483648
    %v871 = vmul.f32 %v869, 1.442695
    %v872 = vpow.pop %v871
    %v873 = vmul.f32 %v870, 1.442695
    %v874 = vpow.pop %v873
    %v875 = vadd.f32 %v872, 1.0
    %v876 = vadd.f32 %v874, 1.0
    %v877 = vrcp.pop %v875
    %v878 = vmul.f32 %v875, %v877
    %v879 = vsub.f32 1.0, %v878
    %v880 = vmul.f32 %v877, %v879
    %v881 = vadd.f32 %v877, %v880
    %vm882 = vweird.f32 %v875
    %vm883 = vweird.f32 %v877
    %vm884 = vmor %vm882, %vm883
    %v885 = vsel %vm884, %v877, %v881
    %v886 = vand.u32 2147483647, %v875
    %vm887 = vcmp.eq.f32.partialorder %v886, 8.507059e+37
    %v888 = vand.u32 %v875, 2147483648
    %v889 = vor.u32 1.1754944e-38, %v888
    %v890 = vsel %vm887, %v889, %v885
    %v891 = vmul.f32 1.0, %v890
    %v892 = vrcp.pop %v876
    %v893 = vmul.f32 %v876, %v892
    %v894 = vsub.f32 1.0, %v893
    %v895 = vmul.f32 %v892, %v894
    %v896 = vadd.f32 %v892, %v895
    %vm897 = vweird.f32 %v876
    %vm898 = vweird.f32 %v892
    %vm899 = vmor %vm897, %vm898
    %v900 = vsel %vm899, %v892, %v896
    %v901 = vand.u32 2147483647, %v876
    %vm902 = vcmp.eq.f32.partialorder %v901, 8.507059e+37
    %v903 = vand.u32 %v876, 2147483648
    %v904 = vor.u32 1.1754944e-38, %v903
    %v905 = vsel %vm902, %v904, %v900
    %v906 = vmul.f32 1.0, %v905
    %v907 = vpack.c.bf16 %v740, %v738
    %v909 = vsel %vm827, %v907, 0
    %911 = vmatpush.bf16.msra.mxu0 0
    %912 = vmatpush.bf16.msra.mxu0 0
    %913 = vmatpush.bf16.msra.mxu0 0
    %914 = vmatpush.bf16.msra.mxu0 0
    %915 = vmatpush.bf16.msra.mxu0 0
    %916 = vmatpush.bf16.msra.mxu0 %v704
    %917 = vmatpush.bf16.msra.mxu0 %v703
    %918 = vmatpush.bf16.msra.mxu0 %v702
    %919 = vmatmul.bf16.gmra.mxu0 %v909
    %v920 = vpop.f32.mrf.mxu0
    %v921 = vadd.f32 0.0, %v920
    %v922 = vpop.f32.mrf.mxu0
    %v923 = vadd.f32 0.0, %v922
    %924 = vdwg.mxu0
    %v925 = vmul.f32 %v891, %v921
    %v926 = vmul.f32 %v906, %v923
    %v927 = vpack.c.bf16 %v758, %v756
    %v929 = vsel %vm827, %v927, 0
    %931 = vmatpush.bf16.msra.mxu0 0
    %932 = vmatpush.bf16.msra.mxu0 0
    %933 = vmatpush.bf16.msra.mxu0 0
    %934 = vmatpush.bf16.msra.mxu0 0
    %935 = vmatpush.bf16.msra.mxu0 0
    %936 = vmatpush.bf16.msra.mxu0 %v704
    %937 = vmatpush.bf16.msra.mxu0 %v703
    %938 = vmatpush.bf16.msra.mxu0 %v702
    %939 = vmatmul.bf16.gmra.mxu0 %v929
    %v940 = vpop.f32.mrf.mxu0
    %v941 = vadd.f32 0.0, %v940
    %v942 = vpop.f32.mrf.mxu0
    %v943 = vadd.f32 0.0, %v942
    %944 = vdwg.mxu0
    %v945 = vmul.f32 %v891, %v941
    %v946 = vmul.f32 %v906, %v943
    %v947 = vpack.c.bf16 %v776, %v774
    %v949 = vsel %vm827, %v947, 0
    %951 = vmatpush.bf16.msra.mxu0 0
    %952 = vmatpush.bf16.msra.mxu0 0
    %953 = vmatpush.bf16.msra.mxu0 0
    %954 = vmatpush.bf16.msra.mxu0 0
    %955 = vmatpush.bf16.msra.mxu0 0
    %956 = vmatpush.bf16.msra.mxu0 %v704
    %957 = vmatpush.bf16.msra.mxu0 %v703
    %958 = vmatpush.bf16.msra.mxu0 %v702
    %959 = vmatmul.bf16.gmra.mxu0 %v949
    %v960 = vpop.f32.mrf.mxu0
    %v961 = vadd.f32 0.0, %v960
    %v962 = vpop.f32.mrf.mxu0
    %v963 = vadd.f32 0.0, %v962
    %964 = vdwg.mxu0
    %v965 = vmul.f32 %v891, %v961
    %v966 = vmul.f32 %v906, %v963
    %vm967 = vcmask 31744
    %968 = vst.msk [vmem:[%s3] sm:$0xff] %vm967, %v925
    %969 = vst.msk [vmem:[%s3 + $0x8] sm:$0xff] %vm967, %v926
    %v970 = vmul.f32 %v925, 1.442695
    %v971 = vpow.pop %v970
    %v972 = vmul.f32 %v926, 1.442695
    %v973 = vpow.pop %v972
    %vm974 = vcmask 64544
    %975 = vst.msk [vmem:[%s3] sm:$0xff] %vm974, %v971
    %976 = vst.msk [vmem:[%s3 + $0x8] sm:$0xff] %vm974, %v973
    %979 = vrot.lane.b32.xlu0 %v945, 8
    %v980 = vpop.permute.xlu0 %979
    %981 = vrot.lane.b32.xlu0 %v946, 8
    %v982 = vpop.permute.xlu0 %981
    %vm985 = vcmask 97344
    %986 = vst.msk [vmem:[%s3] sm:$0xff] %vm985, %v980
    %987 = vst.msk [vmem:[%s3 + $0x8] sm:$0xff] %vm985, %v982
    %v988 = vmul.f32 %v945, 1.442695
    %v989 = vpow.pop %v988
    %v990 = vmul.f32 %v946, 1.442695
    %v991 = vpow.pop %v990
    %994 = vrot.lane.b32.xlu0 %v989, 8
    %v995 = vpop.permute.xlu0 %994
    %996 = vrot.lane.b32.xlu0 %v991, 8
    %v997 = vpop.permute.xlu0 %996
    %vm1000 = vcmask 130144
    %1001 = vst.msk [vmem:[%s3] sm:$0xff] %vm1000, %v995
    %1002 = vst.msk [vmem:[%s3 + $0x8] sm:$0xff] %vm1000, %v997
    %1005 = vrot.lane.b32.xlu0 %v965, 16
    %v1006 = vpop.permute.xlu0 %1005
    %1007 = vrot.lane.b32.xlu0 %v966, 16
    %v1008 = vpop.permute.xlu0 %1007
    %vm1011 = vcmask 162944
    %1012 = vst.msk [vmem:[%s3] sm:$0xff] %vm1011, %v1006
    %1013 = vst.msk [vmem:[%s3 + $0x8] sm:$0xff] %vm1011, %v1008
    %v1014 = vmul.f32 %v965, 1.442695
    %v1015 = vpow.pop %v1014
    %v1016 = vmul.f32 %v966, 1.442695
    %v1017 = vpow.pop %v1016
    %1020 = vrot.lane.b32.xlu0 %v1015, 16
    %v1021 = vpop.permute.xlu0 %1020
    %1022 = vrot.lane.b32.xlu0 %v1017, 16
    %v1023 = vpop.permute.xlu0 %1022
    %vm1026 = vcmask 195744
    %1027 = vst.msk [vmem:[%s3] sm:$0xff] %vm1026, %v1021
    %1028 = vst.msk [vmem:[%s3 + $0x8] sm:$0xff] %vm1026, %v1023
    %v1029 = vsel %vm985, %v841, -inf
    %1030 = vmax.xlane.f32.xlu0 %v1029
    %v1031 = vpop.xlane.xlu0 %1030
    %v1032 = vsel %vm985, %v843, -inf
    %1033 = vmax.xlane.f32.xlu0 %v1032
    %v1034 = vpop.xlane.xlu0 %1033
    %v1035 = vsub.f32 %v841, %v1031
    %v1036 = vsub.f32 %v843, %v1034
    %v1037 = vmul.f32 %v1035, 1.442695
    %v1038 = vpow.pop %v1037
    %v1039 = vmul.f32 %v1036, 1.442695
    %v1040 = vpow.pop %v1039
    %1043 = vrot.lane.b32.xlu0 %v1038, 120
    %v1044 = vpop.permute.xlu0 %1043
    %1045 = vrot.lane.b32.xlu0 %v1040, 120
    %v1046 = vpop.permute.xlu0 %1045
    %v1049 = vsel %vm967, %v1044, 0.0
    %1050 = vadd.xlane.f32.xlu0 %v1049
    %v1051 = vpop.xlane.xlu0 %1050
    %v1052 = vsel %vm967, %v1046, 0.0
    %1053 = vadd.xlane.f32.xlu0 %v1052
    %v1054 = vpop.xlane.xlu0 %1053
    %v1055 = vrcp.pop %v1051
    %v1056 = vrcp.pop %v1054
    %v1057 = vmul.f32 %v1038, %v1055
    %v1058 = vmul.f32 %v1040, %v1056
    %1061 = vrot.lane.b32.xlu0 %v1057, 16
    %v1062 = vpop.permute.xlu0 %1061
    %1063 = vrot.lane.b32.xlu0 %v1058, 16
    %v1064 = vpop.permute.xlu0 %1063
    %vm1067 = vcmask 228544
    %1068 = vst.msk [vmem:[%s3] sm:$0xff] %vm1067, %v1062
    %1069 = vst.msk [vmem:[%s3 + $0x8] sm:$0xff] %vm1067, %v1064
    // Predicated region
    $region18: #{position_predictor_forward.1} parent=1 // pred_check
      _
    $region19: #{position_predictor_forward.1} parent=1 // pred_check_branch
      %1071 = sbr.rel (0) target = $region21
    $region20: #{position_predictor_forward.1} parent=1 // pred_region
      _
    $region21: #{position_predictor_forward.1} parent=1 // pred_fallthru
      _
    // Predicated region
    $region22: #{position_predictor_forward.1} parent=1 // pred_check
      _
    $region23: #{position_predictor_forward.1} parent=1 // pred_check_branch
      %1073 = sbr.rel (0) target = $region25
    $region24: #{position_predictor_forward.1} parent=1 // pred_region
      _
    $region25: #{position_predictor_forward.1} parent=1 // pred_fallthru
      _
    %1074 = vsyncpa [#allocation3], 1

</llo_original>
